<compile_context>
chip_gen: v6e
topology: v6e:2x2x1
jax: 0.10.0
libtpu: 0.0.40
codegen_flags: <defaults>
</compile_context>

<pallas_src>
import functools
import math

import jax
import jax.numpy as jnp
from jax.experimental import pallas as pl
from jax.experimental.pallas import tpu as pltpu


_LN_EPS = 1e-5                   # nn.LayerNorm default


def _default_vmem_limit():
    # 3/4 of physical VMEM, capped at 96 MiB: ~96 MiB on v5e/v6e (128 MiB phys),
    # 48 MiB on v7x (64 MiB phys).  Falls back to a safe 48 MiB.
    try:
        cap = pltpu.get_tpu_info().vmem_capacity_bytes
        return int(min(cap * 3 // 4, 96 * 1024 * 1024))
    except Exception:
        return 48 * 1024 * 1024


_VMEM_LIMIT = _default_vmem_limit()


def _tile(dim, target, align):
    """Largest tile <= target that divides `dim` and is a multiple of `align`;
    falls back to the full dim (always a legal BlockSpec block)."""
    if dim <= target:
        return dim
    t = (target // align) * align
    while t >= align:
        if dim % t == 0:
            return t
        t -= align
    return dim


# ----------------------- tiled linear (+ bias), full-K ---------------------- #

def _linear_kernel(x_ref, w_ref, b_ref, o_ref, *, activation):
    y = jnp.dot(x_ref[...], w_ref[...], preferred_element_type=jnp.float32)
    y = y + b_ref[...].astype(jnp.float32)
    if activation == "relu":
        y = jnp.maximum(y, 0.0)
    o_ref[...] = y.astype(o_ref.dtype)


def linear(x, w, b, activation=None, *, tm=512, tn=1024):
    """x: (M, K) bf16, w: (K, N) bf16, b: (1, N) f32 -> (M, N) x.dtype.
    K is taken full-width (no reduction axis / accumulator)."""
    M, K = x.shape
    _, N = w.shape
    tm = _tile(M, tm, 8)
    tn = _tile(N, tn, 128)
    return pl.pallas_call(
        functools.partial(_linear_kernel, activation=activation),
        out_shape=jax.ShapeDtypeStruct((M, N), x.dtype),
        grid=(M // tm, N // tn),
        in_specs=[
            pl.BlockSpec((tm, K), lambda i, j: (i, 0)),
            pl.BlockSpec((K, tn), lambda i, j: (0, j)),
            pl.BlockSpec((1, tn), lambda i, j: (0, j)),
        ],
        out_specs=pl.BlockSpec((tm, tn), lambda i, j: (i, j)),
        compiler_params=pltpu.CompilerParams(
            dimension_semantics=("parallel", "parallel"),
            vmem_limit_bytes=_VMEM_LIMIT),
    )(x, w, b)


# ------------- linear + residual-add + LayerNorm epilogue (full-K) ---------- #

def _linear_addnorm_kernel(x_ref, w_ref, b_ref, res_ref, g_ref, bt_ref,
                           o_ref, *, eps):
    z = (jnp.dot(x_ref[...], w_ref[...], preferred_element_type=jnp.float32)
         + b_ref[...].astype(jnp.float32)
         + res_ref[...].astype(jnp.float32))
    mean = jnp.mean(z, axis=-1, keepdims=True)
    zc = z - mean
    var = jnp.mean(zc * zc, axis=-1, keepdims=True)
    inv = jax.lax.rsqrt(var + eps)
    o_ref[...] = (zc * inv * g_ref[...].astype(jnp.float32)
                  + bt_ref[...].astype(jnp.float32)).astype(o_ref.dtype)


def linear_addnorm(x, w, b, residual, gamma, beta, *, tm=512, eps=_LN_EPS):
    """LayerNorm(residual + x @ w + b); x: (M, K), w: (K, H), residual: (M, H).
    Single grid axis over M; K and H full-width (no accumulator scratch)."""
    M, K = x.shape
    _, H = w.shape
    tm = _tile(M, tm, 8)
    return pl.pallas_call(
        functools.partial(_linear_addnorm_kernel, eps=eps),
        out_shape=jax.ShapeDtypeStruct((M, H), residual.dtype),
        grid=(M // tm,),
        in_specs=[
            pl.BlockSpec((tm, K), lambda i: (i, 0)),
            pl.BlockSpec((K, H), lambda i: (0, 0)),
            pl.BlockSpec((1, H), lambda i: (0, 0)),
            pl.BlockSpec((tm, H), lambda i: (i, 0)),
            pl.BlockSpec((1, H), lambda i: (0, 0)),
            pl.BlockSpec((1, H), lambda i: (0, 0)),
        ],
        out_specs=pl.BlockSpec((tm, H), lambda i: (i, 0)),
        compiler_params=pltpu.CompilerParams(
            dimension_semantics=("parallel",),
            vmem_limit_bytes=_VMEM_LIMIT),
    )(x, w, b, residual, gamma, beta)


# -------- fused FFN (W1+ReLU+W2) + residual-add + LayerNorm epilogue -------- #

def _ffn_addnorm_kernel(y_ref, w1_ref, b1_ref, w2_ref, b2_ref, g_ref, bt_ref,
                        o_ref, acc_ref, *, eps):
    f = pl.program_id(1)

    @pl.when(f == 0)
    def _():
        acc_ref[...] = jnp.zeros_like(acc_ref)

    y = y_ref[...]
    tf = w1_ref.shape[1]
    # Chunk the (tm, tf) ReLU intermediate so it never spills the vreg file.
    if tf % 256 == 0:
        chunk = 256
    elif tf % 128 == 0:
        chunk = 128
    else:
        chunk = tf
    for c in range(tf // chunk):
        lo = c * chunk
        h = jnp.dot(y, w1_ref[:, lo:lo + chunk],
                    preferred_element_type=jnp.float32)
        h = jnp.maximum(h + b1_ref[:, lo:lo + chunk].astype(jnp.float32), 0.0)
        acc_ref[...] += jnp.dot(h.astype(w2_ref.dtype), w2_ref[lo:lo + chunk, :],
                                preferred_element_type=jnp.float32)

    @pl.when(f == pl.num_programs(1) - 1)
    def _():
        z = (acc_ref[...] + b2_ref[...].astype(jnp.float32)
             + y.astype(jnp.float32))
        mean = jnp.mean(z, axis=-1, keepdims=True)
        zc = z - mean
        var = jnp.mean(zc * zc, axis=-1, keepdims=True)
        inv = jax.lax.rsqrt(var + eps)
        o_ref[...] = (zc * inv * g_ref[...].astype(jnp.float32)
                      + bt_ref[...].astype(jnp.float32)).astype(o_ref.dtype)


def ffn_addnorm(y, w1, b1, w2, b2, gamma, beta, *, tm=512, tf=1024, eps=_LN_EPS):
    """LayerNorm(y + relu(y@w1+b1)@w2 + b2); y: (M, H).  F is a reduction grid
    axis; the (M, F) intermediate never leaves VMEM."""
    M, H = y.shape
    _, F = w1.shape
    tm = _tile(M, tm, 8)
    tf = _tile(F, tf, 128)
    return pl.pallas_call(
        functools.partial(_ffn_addnorm_kernel, eps=eps),
        out_shape=jax.ShapeDtypeStruct((M, H), y.dtype),
        grid=(M // tm, F // tf),
        in_specs=[
            pl.BlockSpec((tm, H), lambda i, f: (i, 0)),
            pl.BlockSpec((H, tf), lambda i, f: (0, f)),
            pl.BlockSpec((1, tf), lambda i, f: (0, f)),
            pl.BlockSpec((tf, H), lambda i, f: (f, 0)),
            pl.BlockSpec((1, H), lambda i, f: (0, 0)),
            pl.BlockSpec((1, H), lambda i, f: (0, 0)),
            pl.BlockSpec((1, H), lambda i, f: (0, 0)),
        ],
        out_specs=pl.BlockSpec((tm, H), lambda i, f: (i, 0)),
        scratch_shapes=[pltpu.VMEM((tm, H), jnp.float32)],
        compiler_params=pltpu.CompilerParams(
            dimension_semantics=("parallel", "arbitrary"),
            vmem_limit_bytes=_VMEM_LIMIT),
    )(y, w1, b1, w2, b2, gamma, beta)


# ----------------------- multi-head attention kernel ------------------------ #

def _mha_kernel(vl_ref, qkv_ref, o_ref, *, num_heads, head_dim, scale, q_tile):
    b = pl.program_id(0)
    qi = pl.program_id(1)
    vl = vl_ref[b]                                    # SMEM scalar, read early

    S = qkv_ref.shape[1]
    Dh = head_dim
    H = num_heads * Dh
    q_start = pl.multiple_of(qi * q_tile, q_tile)

    # Key-position mask (same valid_len per batch row), shared by all heads.
    col = jax.lax.broadcasted_iota(jnp.int32, (q_tile, S), 1)
    mask = col < vl

    # 128-lane-aligned head groups: group loads/stores are unmasked & lane-dense.
    if H % 128 == 0 and 128 % Dh == 0:
        gw = 128
    elif Dh % 128 == 0:
        gw = Dh
    else:
        gw = H                                       # tiny-model fallback
    hpg = gw // Dh

    for g in range(H // gw):
        lo = g * gw
        q_grp = qkv_ref[0, pl.ds(q_start, q_tile), lo:lo + gw]            # (tq, gw)
        k_grp = qkv_ref[0, :, H + lo:H + lo + gw]                         # (S, gw)
        v_grp = qkv_ref[0, :, 2 * H + lo:2 * H + lo + gw]                 # (S, gw)

        outs = []
        for h in range(hpg):                         # static unroll within group
            q = q_grp[:, h * Dh:(h + 1) * Dh]
            k = k_grp[:, h * Dh:(h + 1) * Dh]
            v = v_grp[:, h * Dh:(h + 1) * Dh]
            s = jax.lax.dot_general(q, k, (((1,), (1,)), ((), ())),
                                    preferred_element_type=jnp.float32) * scale
            s = jnp.where(mask, s, -1e6)             # d2l masked_softmax semantics
            s = s - jnp.max(s, axis=-1, keepdims=True)
            p = jnp.exp(s)
            p = p * pl.reciprocal(jnp.sum(p, axis=-1, keepdims=True), approx=True)
            outs.append(jnp.dot(p.astype(v.dtype), v,
                                preferred_element_type=jnp.float32))
        grp = outs[0] if hpg == 1 else jnp.concatenate(outs, axis=-1)
        # Incremental lane-dense store of this group's (tq, gw) result.
        o_ref[0, :, lo:lo + gw] = grp.astype(o_ref.dtype)


def mha_attention(qkv, valid_lens, num_heads, scale, *, tq=256):
    """qkv: (B, S, 3H) bf16 (Q|K|V concatenated), valid_lens: (B,) int32 -> (B, S, H)."""
    B, S, H3 = qkv.shape
    H = H3 // 3
    Dh = H // num_heads
    tq = _tile(S, tq, 8)
    grid_spec = pltpu.PrefetchScalarGridSpec(
        num_scalar_prefetch=1,
        grid=(B, S // tq),
        # Full (S, 3H) slab per batch row; constant across qi -> fetched once per b.
        in_specs=[pl.BlockSpec((1, S, H3), lambda b, qi, vl: (b, 0, 0))],
        out_specs=pl.BlockSpec((1, tq, H), lambda b, qi, vl: (b, qi, 0)),
    )
    # TODO(synk): for S >= 1024, tile the KV axis flash-style (online softmax with
    # m/l/acc scratch) instead of keeping full-S K/V blocks resident in VMEM.
    return pl.pallas_call(
        functools.partial(_mha_kernel, num_heads=num_heads, head_dim=Dh,
                          scale=scale, q_tile=tq),
        out_shape=jax.ShapeDtypeStruct((B, S, H), qkv.dtype),
        grid_spec=grid_spec,
        compiler_params=pltpu.CompilerParams(
            dimension_semantics=("parallel", "parallel"),
            vmem_limit_bytes=_VMEM_LIMIT),
    )(valid_lens, qkv)


# --------------------------- model (glue in JAX) ---------------------------- #

def encoder_block(X, valid_lens, p, num_heads):
    B, S, H = X.shape
    Dh = H // num_heads
    Xf = X.reshape(B * S, H)

    # Fused QKV projection: single tiled matmul against (H, 3H).
    qkv = linear(Xf, p["Wqkv"], p["bqkv"])           # (B*S, 3H)
    qkv = qkv.reshape(B, S, 3 * H)                   # free row-major reshape

    attn = mha_attention(qkv, valid_lens, num_heads, 1.0 / math.sqrt(Dh))
    attn = attn.reshape(B * S, H)

    # Output projection fused with residual-add + LayerNorm (dropout = identity).
    Y = linear_addnorm(attn, p["Wo"], p["bo"], Xf, p["g1"], p["b1"])
    # FFN fused with residual-add + LayerNorm; (M, F) intermediate stays in VMEM.
    Z = ffn_addnorm(Y, p["W1"], p["bf1"], p["W2"], p["bf2"], p["g2"], p["b2"])
    return Z.reshape(B, S, H)


def bert_encoder(tokens, segments, valid_lens, params, num_heads):
    # tokens: (seq, batch) int32 (reference transposes dims 0 and 1 after embedding)
    del segments  # accepted but unused, matching the reference forward()
    # TODO(synk): embedding gather + initial (S,B,H)->(B,S,H) transpose stay in XLA.
    X = params["tok_emb"][tokens]          # (S, B, H)
    X = jnp.transpose(X, (1, 0, 2))        # (B, S, H)
    S = X.shape[1]
    # Reference slices pos_embedding to max(valid_lens)+1, which must equal S for
    # the broadcast add to succeed; slicing to S keeps semantics and stays jittable.
    X = X + params["pos_emb"][:, :S, :]
    vl = valid_lens.astype(jnp.int32)
    for lp in params["layers"]:
        X = encoder_block(X, vl, lp, num_heads)
    return X


def init_params(key, vocab_size, num_hiddens, ffn_num_hiddens, num_heads,
                num_layers, max_len):
    H, F = num_hiddens, ffn_num_hiddens
    scale = 0.02
    keys = jax.random.split(key, 2 + num_layers)
    tok_emb = (jax.random.normal(keys[0], (vocab_size, H), jnp.float32)
               * scale).astype(jnp.bfloat16)
    pos_emb = (jax.random.normal(keys[1], (1, max_len, H), jnp.float32)
               * scale).astype(jnp.bfloat16)

    layers = []
    for i in range(num_layers):
        lk = jax.random.split(keys[2 + i], 4)
        layers.append(dict(
            # fused (Q|K|V) projection weight, pre-cast to bf16 once
            Wqkv=(jax.random.normal(lk[0], (H, 3 * H), jnp.float32) * scale
                  ).astype(jnp.bfloat16),
            bqkv=jnp.zeros((1, 3 * H), jnp.float32),
            Wo=(jax.random.normal(lk[1], (H, H), jnp.float32) * scale
                ).astype(jnp.bfloat16),
            bo=jnp.zeros((1, H), jnp.float32),
            g1=jnp.ones((1, H), jnp.float32),
            b1=jnp.zeros((1, H), jnp.float32),
            W1=(jax.random.normal(lk[2], (H, F), jnp.float32) * scale
                ).astype(jnp.bfloat16),
            bf1=jnp.zeros((1, F), jnp.float32),
            W2=(jax.random.normal(lk[3], (F, H), jnp.float32) * scale
                ).astype(jnp.bfloat16),
            bf2=jnp.zeros((1, H), jnp.float32),
            g2=jnp.ones((1, H), jnp.float32),
            b2=jnp.zeros((1, H), jnp.float32),
        ))
    return dict(tok_emb=tok_emb, pos_emb=pos_emb, layers=layers)


if __name__ == "__main__":
    vocab_size, num_hiddens = 50, 32
    num_heads, num_layers = 4, 2
    ffn_num_hiddens, max_len = 64, 16
    batch, seq = 2, 8

    key = jax.random.PRNGKey(0)
    pkey, tkey = jax.random.split(key)
    params = init_params(pkey, vocab_size, num_hiddens, ffn_num_hiddens,
                         num_heads, num_layers, max_len)

    tokens = jax.random.randint(tkey, (seq, batch), 0, vocab_size, dtype=jnp.int32)
    segments = jnp.zeros((seq, batch), jnp.int32)          # unused by forward
    # max(valid_lens)+1 must equal seq for the pos-embedding add (as in reference)
    valid_lens = jnp.array([seq - 1, seq - 2], jnp.int32)

    fwd = jax.jit(functools.partial(bert_encoder, num_heads=num_heads))
    out = fwd(tokens, segments, valid_lens, params)
    out = jax.block_until_ready(out)
    assert out.shape == (batch, seq, num_hiddens)
    assert bool(jnp.all(jnp.isfinite(out.astype(jnp.float32))))
    print("KERNEL_OK")
</pallas_src>

<mosaic_0001>
module attributes {stable_mosaic.version = 11 : i64} {
  func.func @_linear_kernel(%arg0: i32, %arg1: i32, %arg2: memref<16x32xbf16, #tpu.memory_space<vmem>>, %arg3: memref<32x96xbf16, #tpu.memory_space<vmem>>, %arg4: memref<1x96xf32, #tpu.memory_space<vmem>>, %arg5: memref<16x96xbf16, #tpu.memory_space<vmem>>) attributes {dimension_semantics = [#tpu.dimension_semantics<parallel>, #tpu.dimension_semantics<parallel>], iteration_bounds = array<i64: 1, 1>, scalar_prefetch = 0 : i64, scratch_operands = 0 : i64, tpu.core_type = #tpu.core_type<tc>, window_params = [{transform_indices = @transform_0, window_bounds = array<i64: 16, 32>}, {transform_indices = @transform_1, window_bounds = array<i64: 32, 96>}, {transform_indices = @transform_2, window_bounds = array<i64: 1, 96>}, {transform_indices = @transform_3, window_bounds = array<i64: 16, 96>}]} {
    %c0 = arith.constant 0 : index
    %c0_0 = arith.constant 0 : index
    %0 = vector.load %arg2[%c0, %c0_0] : memref<16x32xbf16, #tpu.memory_space<vmem>>, vector<16x32xbf16>
    %c0_1 = arith.constant 0 : index
    %c0_2 = arith.constant 0 : index
    %1 = vector.load %arg3[%c0_1, %c0_2] : memref<32x96xbf16, #tpu.memory_space<vmem>>, vector<32x96xbf16>
    %cst = arith.constant dense<0.000000e+00> : vector<16x96xf32>
    %2 = tpu.matmul %0, %1, %cst {dimension_numbers = #tpu.dot_dimension_numbers<[1], [0], [0], [1], [0, 0, 1, 1], [], []>} : vector<16x32xbf16>, vector<32x96xbf16>, vector<16x96xf32> -> vector<16x96xf32>
    %c0_3 = arith.constant 0 : index
    %c0_4 = arith.constant 0 : index
    %3 = vector.load %arg4[%c0_3, %c0_4] : memref<1x96xf32, #tpu.memory_space<vmem>>, vector<1x96xf32>
    %4 = vector.broadcast %3 : vector<1x96xf32> to vector<16x96xf32>
    %5 = arith.addf %2, %4 : vector<16x96xf32>
    %6 = arith.truncf %5 : vector<16x96xf32> to vector<16x96xbf16>
    %c0_5 = arith.constant 0 : index
    %c0_6 = arith.constant 0 : index
    %7 = vector.load %arg5[%c0_5, %c0_6] : memref<16x96xbf16, #tpu.memory_space<vmem>>, vector<16x96xbf16>
    tpu.vector_store %arg5[%c0_5, %c0_6], %6 {strides = array<i32>} : memref<16x96xbf16, #tpu.memory_space<vmem>>, vector<16x96xbf16>,
    return
  }
  func.func @transform_0(%arg0: i32, %arg1: i32) -> (i32, i32) {
    %c0_i32 = arith.constant 0 : i32
    %c0_i32_0 = arith.constant 0 : i32
    return %arg0, %c0_i32 : i32, i32
  }
  func.func @transform_1(%arg0: i32, %arg1: i32) -> (i32, i32) {
    %c0_i32 = arith.constant 0 : i32
    %c0_i32_0 = arith.constant 0 : i32
    return %c0_i32, %arg1 : i32, i32
  }
  func.func @transform_2(%arg0: i32, %arg1: i32) -> (i32, i32) {
    %c0_i32 = arith.constant 0 : i32
    %c0_i32_0 = arith.constant 0 : i32
    return %c0_i32, %arg1 : i32, i32
  }
  func.func @transform_3(%arg0: i32, %arg1: i32) -> (i32, i32) {
    %c0_i32 = arith.constant 0 : i32
    return %arg0, %arg1 : i32, i32
  }
}

module attributes {stable_mosaic.version = 11 : i64} {
  func.func @_linear_addnorm_kernel(%arg0: i32, %arg1: memref<16x32xbf16, #tpu.memory_space<vmem>>, %arg2: memref<32x32xbf16, #tpu.memory_space<vmem>>, %arg3: memref<1x32xf32, #tpu.memory_space<vmem>>, %arg4: memref<16x32xbf16, #tpu.memory_space<vmem>>, %arg5: memref<1x32xf32, #tpu.memory_space<vmem>>, %arg6: memref<1x32xf32, #tpu.memory_space<vmem>>, %arg7: memref<16x32xbf16, #tpu.memory_space<vmem>>) attributes {dimension_semantics = [#tpu.dimension_semantics<parallel>], iteration_bounds = array<i64: 1>, scalar_prefetch = 0 : i64, scratch_operands = 0 : i64, tpu.core_type = #tpu.core_type<tc>, window_params = [{transform_indices = @transform_0, window_bounds = array<i64: 16, 32>}, {pipeline_mode = #tpu.pipeline_mode<synchronous>, transform_indices = @transform_1, window_bounds = array<i64: 32, 32>}, {pipeline_mode = #tpu.pipeline_mode<synchronous>, transform_indices = @transform_2, window_bounds = array<i64: 1, 32>}, {transform_indices = @transform_3, window_bounds = array<i64: 16, 32>}, {pipeline_mode = #tpu.pipeline_mode<synchronous>, transform_indices = @transform_4, window_bounds = array<i64: 1, 32>}, {pipeline_mode = #tpu.pipeline_mode<synchronous>, transform_indices = @transform_5, window_bounds = array<i64: 1, 32>}, {transform_indices = @transform_6, window_bounds = array<i64: 16, 32>}]} {
    %c0 = arith.constant 0 : index
    %c0_0 = arith.constant 0 : index
    %0 = vector.load %arg1[%c0, %c0_0] : memref<16x32xbf16, #tpu.memory_space<vmem>>, vector<16x32xbf16>
    %c0_1 = arith.constant 0 : index
    %c0_2 = arith.constant 0 : index
    %1 = vector.load %arg2[%c0_1, %c0_2] : memref<32x32xbf16, #tpu.memory_space<vmem>>, vector<32x32xbf16>
    %cst = arith.constant dense<0.000000e+00> : vector<16x32xf32>
    %2 = tpu.matmul %0, %1, %cst {dimension_numbers = #tpu.dot_dimension_numbers<[1], [0], [0], [1], [0, 0, 1, 1], [], []>} : vector<16x32xbf16>, vector<32x32xbf16>, vector<16x32xf32> -> vector<16x32xf32>
    %c0_3 = arith.constant 0 : index
    %c0_4 = arith.constant 0 : index
    %3 = vector.load %arg3[%c0_3, %c0_4] : memref<1x32xf32, #tpu.memory_space<vmem>>, vector<1x32xf32>
    %4 = vector.broadcast %3 : vector<1x32xf32> to vector<16x32xf32>
    %5 = arith.addf %2, %4 : vector<16x32xf32>
    %c0_5 = arith.constant 0 : index
    %c0_6 = arith.constant 0 : index
    %6 = vector.load %arg4[%c0_5, %c0_6] : memref<16x32xbf16, #tpu.memory_space<vmem>>, vector<16x32xbf16>
    %7 = arith.extf %6 : vector<16x32xbf16> to vector<16x32xf32>
    %8 = arith.addf %5, %7 : vector<16x32xf32>
    %cst_7 = arith.constant dense<0.000000e+00> : vector<16xf32>
    %9 = vector.multi_reduction <add>, %8, %cst_7 [1] : vector<16x32xf32> to vector<16xf32>
    %10 = vector.shape_cast %9 : vector<16xf32> to vector<16x1xf32>
    %cst_8 = arith.constant 3.200000e+01 : f32
    %11 = vector.broadcast %cst_8 : f32 to vector<16x1xf32>
    %12 = arith.divf %10, %11 : vector<16x1xf32>
    %13 = vector.broadcast %12 : vector<16x1xf32> to vector<16x32xf32>
    %14 = arith.subf %8, %13 : vector<16x32xf32>
    %15 = arith.mulf %14, %14 : vector<16x32xf32>
    %cst_9 = arith.constant dense<0.000000e+00> : vector<16xf32>
    %16 = vector.multi_reduction <add>, %15, %cst_9 [1] : vector<16x32xf32> to vector<16xf32>
    %17 = vector.shape_cast %16 : vector<16xf32> to vector<16x1xf32>
    %cst_10 = arith.constant 3.200000e+01 : f32
    %18 = vector.broadcast %cst_10 : f32 to vector<16x1xf32>
    %19 = arith.divf %17, %18 : vector<16x1xf32>
    %cst_11 = arith.constant 9.99999974E-6 : f32
    %20 = vector.broadcast %cst_11 : f32 to vector<16x1xf32>
    %21 = arith.addf %19, %20 : vector<16x1xf32>
    %22 = math.rsqrt %21 : vector<16x1xf32>
    %23 = vector.broadcast %22 : vector<16x1xf32> to vector<16x32xf32>
    %24 = arith.mulf %14, %23 : vector<16x32xf32>
    %c0_12 = arith.constant 0 : index
    %c0_13 = arith.constant 0 : index
    %25 = vector.load %arg5[%c0_12, %c0_13] : memref<1x32xf32, #tpu.memory_space<vmem>>, vector<1x32xf32>
    %26 = vector.broadcast %25 : vector<1x32xf32> to vector<16x32xf32>
    %27 = arith.mulf %24, %26 : vector<16x32xf32>
    %c0_14 = arith.constant 0 : index
    %c0_15 = arith.constant 0 : index
    %28 = vector.load %arg6[%c0_14, %c0_15] : memref<1x32xf32, #tpu.memory_space<vmem>>, vector<1x32xf32>
    %29 = vector.broadcast %28 : vector<1x32xf32> to vector<16x32xf32>
    %30 = arith.addf %27, %29 : vector<16x32xf32>
    %31 = arith.truncf %30 : vector<16x32xf32> to vector<16x32xbf16>
    %c0_16 = arith.constant 0 : index
    %c0_17 = arith.constant 0 : index
    %32 = vector.load %arg7[%c0_16, %c0_17] : memref<16x32xbf16, #tpu.memory_space<vmem>>, vector<16x32xbf16>
    tpu.vector_store %arg7[%c0_16, %c0_17], %31 {strides = array<i32>} : memref<16x32xbf16, #tpu.memory_space<vmem>>, vector<16x32xbf16>,
    return
  }
  func.func @transform_0(%arg0: i32) -> (i32, i32) {
    %c0_i32 = arith.constant 0 : i32
    %c0_i32_0 = arith.constant 0 : i32
    return %arg0, %c0_i32 : i32, i32
  }
  func.func @transform_1(%arg0: i32) -> (i32, i32) {
    %c0_i32 = arith.constant 0 : i32
    %c0_i32_0 = arith.constant 0 : i32
    %c0_i32_1 = arith.constant 0 : i32
    return %c0_i32, %c0_i32_0 : i32, i32
  }
  func.func @transform_2(%arg0: i32) -> (i32, i32) {
    %c0_i32 = arith.constant 0 : i32
    %c0_i32_0 = arith.constant 0 : i32
    %c0_i32_1 = arith.constant 0 : i32
    return %c0_i32, %c0_i32_0 : i32, i32
  }
  func.func @transform_3(%arg0: i32) -> (i32, i32) {
    %c0_i32 = arith.constant 0 : i32
    %c0_i32_0 = arith.constant 0 : i32
    return %arg0, %c0_i32 : i32, i32
  }
  func.func @transform_4(%arg0: i32) -> (i32, i32) {
    %c0_i32 = arith.constant 0 : i32
    %c0_i32_0 = arith.constant 0 : i32
    %c0_i32_1 = arith.constant 0 : i32
    return %c0_i32, %c0_i32_0 : i32, i32
  }
  func.func @transform_5(%arg0: i32) -> (i32, i32) {
    %c0_i32 = arith.constant 0 : i32
    %c0_i32_0 = arith.constant 0 : i32
    %c0_i32_1 = arith.constant 0 : i32
    return %c0_i32, %c0_i32_0 : i32, i32
  }
  func.func @transform_6(%arg0: i32) -> (i32, i32) {
    %c0_i32 = arith.constant 0 : i32
    %c0_i32_0 = arith.constant 0 : i32
    return %arg0, %c0_i32 : i32, i32
  }
}

module attributes {stable_mosaic.version = 11 : i64} {
  func.func @_mha_kernel(%arg0: i32, %arg1: i32, %arg2: memref<2xi32, #tpu.memory_space<smem>>, %arg3: memref<1x8x96xbf16, #tpu.memory_space<vmem>>, %arg4: memref<1x8x32xbf16, #tpu.memory_space<vmem>>) attributes {dimension_semantics = [#tpu.dimension_semantics<parallel>, #tpu.dimension_semantics<parallel>], iteration_bounds = array<i64: 2, 1>, scalar_prefetch = 1 : i64, scratch_operands = 0 : i64, tpu.core_type = #tpu.core_type<tc>, window_params = [{transform_indices = @transform_0, window_bounds = array<i64: 1, 8, 96>}, {transform_indices = @transform_1, window_bounds = array<i64: 1, 8, 32>}]} {
    %0 = arith.index_cast %arg0 : i32 to index
    %1 = memref.load %arg2[%0] : memref<2xi32, #tpu.memory_space<smem>>
    %c8_i32 = arith.constant 8 : i32
    %2 = arith.muli %arg1, %c8_i32 : i32
    %3 = tpu.assume_multiple %2, 8 : i32
    %4 = tpu.iota {dimensions = array<i32: 1>} : vector<8x8xi32>
    %5 = vector.broadcast %1 : i32 to vector<8x8xi32>
    %6 = arith.cmpi slt, %4, %5 : vector<8x8xi32>
    %c0 = arith.constant 0 : index
    %7 = arith.index_cast %3 : i32 to index
    %c0_0 = arith.constant 0 : index
    %8 = vector.load %arg3[%c0, %7, %c0_0] : memref<1x8x96xbf16, #tpu.memory_space<vmem>>, vector<1x8x32xbf16>
    %9 = vector.shape_cast %8 : vector<1x8x32xbf16> to vector<8x32xbf16>
    %c0_1 = arith.constant 0 : index
    %c0_2 = arith.constant 0 : index
    %c32 = arith.constant 32 : index
    %10 = vector.load %arg3[%c0_1, %c0_2, %c32] : memref<1x8x96xbf16, #tpu.memory_space<vmem>>, vector<1x8x32xbf16>
    %11 = vector.shape_cast %10 : vector<1x8x32xbf16> to vector<8x32xbf16>
    %c0_3 = arith.constant 0 : index
    %c0_4 = arith.constant 0 : index
    %c64 = arith.constant 64 : index
    %12 = vector.load %arg3[%c0_3, %c0_4, %c64] : memref<1x8x96xbf16, #tpu.memory_space<vmem>>, vector<1x8x32xbf16>
    %13 = vector.shape_cast %12 : vector<1x8x32xbf16> to vector<8x32xbf16>
    %14 = vector.extract_strided_slice %9 {offsets = [0, 0], sizes = [8, 8], strides = [1, 1]} : vector<8x32xbf16> to vector<8x8xbf16>
    %15 = vector.extract_strided_slice %11 {offsets = [0, 0], sizes = [8, 8], strides = [1, 1]} : vector<8x32xbf16> to vector<8x8xbf16>
    %16 = vector.extract_strided_slice %13 {offsets = [0, 0], sizes = [8, 8], strides = [1, 1]} : vector<8x32xbf16> to vector<8x8xbf16>
    %cst = arith.constant dense<0.000000e+00> : vector<8x8xf32>
    %17 = tpu.matmul %14, %15, %cst {dimension_numbers = #tpu.dot_dimension_numbers<[1], [1], [0], [0], [0, 0, 1, 0], [], []>} : vector<8x8xbf16>, vector<8x8xbf16>, vector<8x8xf32> -> vector<8x8xf32>
    %cst_5 = arith.constant 0.353553385 : f32
    %18 = vector.broadcast %cst_5 : f32 to vector<8x8xf32>
    %19 = arith.mulf %17, %18 : vector<8x8xf32>
    %cst_6 = arith.constant -1.000000e+06 : f32
    %20 = vector.broadcast %cst_6 : f32 to vector<8x8xf32>
    %21 = arith.select %6, %19, %20 : vector<8x8xi1>, vector<8x8xf32>
    %cst_7 = arith.constant dense<0xFF800000> : vector<8xf32>
    %22 = vector.multi_reduction <maximumf>, %21, %cst_7 [1] : vector<8x8xf32> to vector<8xf32>
    %23 = vector.shape_cast %22 : vector<8xf32> to vector<8x1xf32>
    %24 = vector.broadcast %23 : vector<8x1xf32> to vector<8x8xf32>
    %25 = arith.subf %21, %24 : vector<8x8xf32>
    %26 = math.exp %25 : vector<8x8xf32>
    %cst_8 = arith.constant dense<0.000000e+00> : vector<8xf32>
    %27 = vector.multi_reduction <add>, %26, %cst_8 [1] : vector<8x8xf32> to vector<8xf32>
    %28 = vector.shape_cast %27 : vector<8xf32> to vector<8x1xf32>
    %29 = tpu.reciprocal %28 {approx = true} : vector<8x1xf32> -> vector<8x1xf32>
    %30 = vector.broadcast %29 : vector<8x1xf32> to vector<8x8xf32>
    %31 = arith.mulf %26, %30 : vector<8x8xf32>
    %32 = arith.truncf %31 : vector<8x8xf32> to vector<8x8xbf16>
    %cst_9 = arith.constant dense<0.000000e+00> : vector<8x8xf32>
    %33 = tpu.matmul %32, %16, %cst_9 {dimension_numbers = #tpu.dot_dimension_numbers<[1], [0], [0], [1], [0, 0, 1, 1], [], []>} : vector<8x8xbf16>, vector<8x8xbf16>, vector<8x8xf32> -> vector<8x8xf32>
    %34 = vector.extract_strided_slice %9 {offsets = [0, 8], sizes = [8, 8], strides = [1, 1]} : vector<8x32xbf16> to vector<8x8xbf16>
    %35 = vector.extract_strided_slice %11 {offsets = [0, 8], sizes = [8, 8], strides = [1, 1]} : vector<8x32xbf16> to vector<8x8xbf16>
    %36 = vector.extract_strided_slice %13 {offsets = [0, 8], sizes = [8, 8], strides = [1, 1]} : vector<8x32xbf16> to vector<8x8xbf16>
    %cst_10 = arith.constant dense<0.000000e+00> : vector<8x8xf32>
    %37 = tpu.matmul %34, %35, %cst_10 {dimension_numbers = #tpu.dot_dimension_numbers<[1], [1], [0], [0], [0, 0, 1, 0], [], []>} : vector<8x8xbf16>, vector<8x8xbf16>, vector<8x8xf32> -> vector<8x8xf32>
    %cst_11 = arith.constant 0.353553385 : f32
    %38 = vector.broadcast %cst_11 : f32 to vector<8x8xf32>
    %39 = arith.mulf %37, %38 : vector<8x8xf32>
    %cst_12 = arith.constant -1.000000e+06 : f32
    %40 = vector.broadcast %cst_12 : f32 to vector<8x8xf32>
    %41 = arith.select %6, %39, %40 : vector<8x8xi1>, vector<8x8xf32>
    %cst_13 = arith.constant dense<0xFF800000> : vector<8xf32>
    %42 = vector.multi_reduction <maximumf>, %41, %cst_13 [1] : vector<8x8xf32> to vector<8xf32>
    %43 = vector.shape_cast %42 : vector<8xf32> to vector<8x1xf32>
    %44 = vector.broadcast %43 : vector<8x1xf32> to vector<8x8xf32>
    %45 = arith.subf %41, %44 : vector<8x8xf32>
    %46 = math.exp %45 : vector<8x8xf32>
    %cst_14 = arith.constant dense<0.000000e+00> : vector<8xf32>
    %47 = vector.multi_reduction <add>, %46, %cst_14 [1] : vector<8x8xf32> to vector<8xf32>
    %48 = vector.shape_cast %47 : vector<8xf32> to vector<8x1xf32>
    %49 = tpu.reciprocal %48 {approx = true} : vector<8x1xf32> -> vector<8x1xf32>
    %50 = vector.broadcast %49 : vector<8x1xf32> to vector<8x8xf32>
    %51 = arith.mulf %46, %50 : vector<8x8xf32>
    %52 = arith.truncf %51 : vector<8x8xf32> to vector<8x8xbf16>
    %cst_15 = arith.constant dense<0.000000e+00> : vector<8x8xf32>
    %53 = tpu.matmul %52, %36, %cst_15 {dimension_numbers = #tpu.dot_dimension_numbers<[1], [0], [0], [1], [0, 0, 1, 1], [], []>} : vector<8x8xbf16>, vector<8x8xbf16>, vector<8x8xf32> -> vector<8x8xf32>
    %54 = vector.extract_strided_slice %9 {offsets = [0, 16], sizes = [8, 8], strides = [1, 1]} : vector<8x32xbf16> to vector<8x8xbf16>
    %55 = vector.extract_strided_slice %11 {offsets = [0, 16], sizes = [8, 8], strides = [1, 1]} : vector<8x32xbf16> to vector<8x8xbf16>
    %56 = vector.extract_strided_slice %13 {offsets = [0, 16], sizes = [8, 8], strides = [1, 1]} : vector<8x32xbf16> to vector<8x8xbf16>
    %cst_16 = arith.constant dense<0.000000e+00> : vector<8x8xf32>
    %57 = tpu.matmul %54, %55, %cst_16 {dimension_numbers = #tpu.dot_dimension_numbers<[1], [1], [0], [0], [0, 0, 1, 0], [], []>} : vector<8x8xbf16>, vector<8x8xbf16>, vector<8x8xf32> -> vector<8x8xf32>
    %cst_17 = arith.constant 0.353553385 : f32
    %58 = vector.broadcast %cst_17 : f32 to vector<8x8xf32>
    %59 = arith.mulf %57, %58 : vector<8x8xf32>
    %cst_18 = arith.constant -1.000000e+06 : f32
    %60 = vector.broadcast %cst_18 : f32 to vector<8x8xf32>
    %61 = arith.select %6, %59, %60 : vector<8x8xi1>, vector<8x8xf32>
    %cst_19 = arith.constant dense<0xFF800000> : vector<8xf32>
    %62 = vector.multi_reduction <maximumf>, %61, %cst_19 [1] : vector<8x8xf32> to vector<8xf32>
    %63 = vector.shape_cast %62 : vector<8xf32> to vector<8x1xf32>
    %64 = vector.broadcast %63 : vector<8x1xf32> to vector<8x8xf32>
    %65 = arith.subf %61, %64 : vector<8x8xf32>
    %66 = math.exp %65 : vector<8x8xf32>
    %cst_20 = arith.constant dense<0.000000e+00> : vector<8xf32>
    %67 = vector.multi_reduction <add>, %66, %cst_20 [1] : vector<8x8xf32> to vector<8xf32>
    %68 = vector.shape_cast %67 : vector<8xf32> to vector<8x1xf32>
    %69 = tpu.reciprocal %68 {approx = true} : vector<8x1xf32> -> vector<8x1xf32>
    %70 = vector.broadcast %69 : vector<8x1xf32> to vector<8x8xf32>
    %71 = arith.mulf %66, %70 : vector<8x8xf32>
    %72 = arith.truncf %71 : vector<8x8xf32> to vector<8x8xbf16>
    %cst_21 = arith.constant dense<0.000000e+00> : vector<8x8xf32>
    %73 = tpu.matmul %72, %56, %cst_21 {dimension_numbers = #tpu.dot_dimension_numbers<[1], [0], [0], [1], [0, 0, 1, 1], [], []>} : vector<8x8xbf16>, vector<8x8xbf16>, vector<8x8xf32> -> vector<8x8xf32>
    %74 = vector.extract_strided_slice %9 {offsets = [0, 24], sizes = [8, 8], strides = [1, 1]} : vector<8x32xbf16> to vector<8x8xbf16>
    %75 = vector.extract_strided_slice %11 {offsets = [0, 24], sizes = [8, 8], strides = [1, 1]} : vector<8x32xbf16> to vector<8x8xbf16>
    %76 = vector.extract_strided_slice %13 {offsets = [0, 24], sizes = [8, 8], strides = [1, 1]} : vector<8x32xbf16> to vector<8x8xbf16>
    %cst_22 = arith.constant dense<0.000000e+00> : vector<8x8xf32>
    %77 = tpu.matmul %74, %75, %cst_22 {dimension_numbers = #tpu.dot_dimension_numbers<[1], [1], [0], [0], [0, 0, 1, 0], [], []>} : vector<8x8xbf16>, vector<8x8xbf16>, vector<8x8xf32> -> vector<8x8xf32>
    %cst_23 = arith.constant 0.353553385 : f32
    %78 = vector.broadcast %cst_23 : f32 to vector<8x8xf32>
    %79 = arith.mulf %77, %78 : vector<8x8xf32>
    %cst_24 = arith.constant -1.000000e+06 : f32
    %80 = vector.broadcast %cst_24 : f32 to vector<8x8xf32>
    %81 = arith.select %6, %79, %80 : vector<8x8xi1>, vector<8x8xf32>
    %cst_25 = arith.constant dense<0xFF800000> : vector<8xf32>
    %82 = vector.multi_reduction <maximumf>, %81, %cst_25 [1] : vector<8x8xf32> to vector<8xf32>
    %83 = vector.shape_cast %82 : vector<8xf32> to vector<8x1xf32>
    %84 = vector.broadcast %83 : vector<8x1xf32> to vector<8x8xf32>
    %85 = arith.subf %81, %84 : vector<8x8xf32>
    %86 = math.exp %85 : vector<8x8xf32>
    %cst_26 = arith.constant dense<0.000000e+00> : vector<8xf32>
    %87 = vector.multi_reduction <add>, %86, %cst_26 [1] : vector<8x8xf32> to vector<8xf32>
    %88 = vector.shape_cast %87 : vector<8xf32> to vector<8x1xf32>
    %89 = tpu.reciprocal %88 {approx = true} : vector<8x1xf32> -> vector<8x1xf32>
    %90 = vector.broadcast %89 : vector<8x1xf32> to vector<8x8xf32>
    %91 = arith.mulf %86, %90 : vector<8x8xf32>
    %92 = arith.truncf %91 : vector<8x8xf32> to vector<8x8xbf16>
    %cst_27 = arith.constant dense<0.000000e+00> : vector<8x8xf32>
    %93 = tpu.matmul %92, %76, %cst_27 {dimension_numbers = #tpu.dot_dimension_numbers<[1], [0], [0], [1], [0, 0, 1, 1], [], []>} : vector<8x8xbf16>, vector<8x8xbf16>, vector<8x8xf32> -> vector<8x8xf32>
    %94 = tpu.concatenate %33, %53, %73, %93 in 1 : vector<8x8xf32>, vector<8x8xf32>, vector<8x8xf32>, vector<8x8xf32> -> vector<8x32xf32>
    %95 = arith.truncf %94 : vector<8x32xf32> to vector<8x32xbf16>
    %c0_28 = arith.constant 0 : index
    %c0_29 = arith.constant 0 : index
    %c0_30 = arith.constant 0 : index
    %96 = vector.load %arg4[%c0_28, %c0_29, %c0_30] : memref<1x8x32xbf16, #tpu.memory_space<vmem>>, vector<1x8x32xbf16>
    %97 = vector.shape_cast %96 : vector<1x8x32xbf16> to vector<8x32xbf16>
    %98 = vector.shape_cast %95 : vector<8x32xbf16> to vector<1x8x32xbf16>
    tpu.vector_store %arg4[%c0_28, %c0_29, %c0_30], %98 {strides = array<i32>} : memref<1x8x32xbf16, #tpu.memory_space<vmem>>, vector<1x8x32xbf16>,
    return
  }
  func.func @transform_0(%arg0: i32, %arg1: i32, %arg2: memref<2xi32, #tpu.memory_space<smem>>) -> (i32, i32, i32) {
    %c0_i32 = arith.constant 0 : i32
    %c0_i32_0 = arith.constant 0 : i32
    %c0_i32_1 = arith.constant 0 : i32
    return %arg0, %c0_i32, %c0_i32_0 : i32, i32, i32
  }
  func.func @transform_1(%arg0: i32, %arg1: i32, %arg2: memref<2xi32, #tpu.memory_space<smem>>) -> (i32, i32, i32) {
    %c0_i32 = arith.constant 0 : i32
    %c0_i32_0 = arith.constant 0 : i32
    return %arg0, %arg1, %c0_i32 : i32, i32, i32
  }
}

module attributes {stable_mosaic.version = 11 : i64} {
  func.func @_ffn_addnorm_kernel(%arg0: i32, %arg1: i32, %arg2: memref<16x32xbf16, #tpu.memory_space<vmem>>, %arg3: memref<32x64xbf16, #tpu.memory_space<vmem>>, %arg4: memref<1x64xf32, #tpu.memory_space<vmem>>, %arg5: memref<64x32xbf16, #tpu.memory_space<vmem>>, %arg6: memref<1x32xf32, #tpu.memory_space<vmem>>, %arg7: memref<1x32xf32, #tpu.memory_space<vmem>>, %arg8: memref<1x32xf32, #tpu.memory_space<vmem>>, %arg9: memref<16x32xbf16, #tpu.memory_space<vmem>>, %arg10: memref<16x32xf32, #tpu.memory_space<vmem>>) attributes {dimension_semantics = [#tpu.dimension_semantics<parallel>, #tpu.dimension_semantics<arbitrary>], iteration_bounds = array<i64: 1, 1>, scalar_prefetch = 0 : i64, scratch_operands = 1 : i64, tpu.core_type = #tpu.core_type<tc>, window_params = [{transform_indices = @transform_0, window_bounds = array<i64: 16, 32>}, {transform_indices = @transform_1, window_bounds = array<i64: 32, 64>}, {transform_indices = @transform_2, window_bounds = array<i64: 1, 64>}, {transform_indices = @transform_3, window_bounds = array<i64: 64, 32>}, {pipeline_mode = #tpu.pipeline_mode<synchronous>, transform_indices = @transform_4, window_bounds = array<i64: 1, 32>}, {pipeline_mode = #tpu.pipeline_mode<synchronous>, transform_indices = @transform_5, window_bounds = array<i64: 1, 32>}, {pipeline_mode = #tpu.pipeline_mode<synchronous>, transform_indices = @transform_6, window_bounds = array<i64: 1, 32>}, {transform_indices = @transform_7, window_bounds = array<i64: 16, 32>}]} {
    %c0_i32 = arith.constant 0 : i32
    %0 = arith.cmpi eq, %arg1, %c0_i32 : i32
    %1 = arith.extui %0 : i1 to i32
    %c0_i32_0 = arith.constant 0 : i32
    %2 = arith.cmpi ne, %1, %c0_i32_0 : i32
    scf.if %2 {
      %cst_16 = arith.constant 0.000000e+00 : f32
      %20 = vector.broadcast %cst_16 : f32 to vector<16x32xf32>
      %c0_17 = arith.constant 0 : index
      %c0_18 = arith.constant 0 : index
      %21 = vector.load %arg10[%c0_17, %c0_18] : memref<16x32xf32, #tpu.memory_space<vmem>>, vector<16x32xf32>
      tpu.vector_store %arg10[%c0_17, %c0_18], %20 {strides = array<i32>} : memref<16x32xf32, #tpu.memory_space<vmem>>, vector<16x32xf32>,
    } else {
    }
    %c0 = arith.constant 0 : index
    %c0_1 = arith.constant 0 : index
    %3 = vector.load %arg2[%c0, %c0_1] : memref<16x32xbf16, #tpu.memory_space<vmem>>, vector<16x32xbf16>
    %c0_2 = arith.constant 0 : index
    %c0_3 = arith.constant 0 : index
    %4 = vector.load %arg3[%c0_2, %c0_3] : memref<32x64xbf16, #tpu.memory_space<vmem>>, vector<32x64xbf16>
    %cst = arith.constant dense<0.000000e+00> : vector<16x64xf32>
    %5 = tpu.matmul %3, %4, %cst {dimension_numbers = #tpu.dot_dimension_numbers<[1], [0], [0], [1], [0, 0, 1, 1], [], []>} : vector<16x32xbf16>, vector<32x64xbf16>, vector<16x64xf32> -> vector<16x64xf32>
    %c0_4 = arith.constant 0 : index
    %c0_5 = arith.constant 0 : index
    %6 = vector.load %arg4[%c0_4, %c0_5] : memref<1x64xf32, #tpu.memory_space<vmem>>, vector<1x64xf32>
    %7 = vector.broadcast %6 : vector<1x64xf32> to vector<16x64xf32>
    %8 = arith.addf %5, %7 : vector<16x64xf32>
    %cst_6 = arith.constant 0.000000e+00 : f32
    %9 = vector.broadcast %cst_6 : f32 to vector<16x64xf32>
    %10 = arith.maximumf %8, %9 : vector<16x64xf32>
    %c0_7 = arith.constant 0 : index
    %c0_8 = arith.constant 0 : index
    %11 = vector.load %arg10[%c0_7, %c0_8] : memref<16x32xf32, #tpu.memory_space<vmem>>, vector<16x32xf32>
    %12 = arith.truncf %10 : vector<16x64xf32> to vector<16x64xbf16>
    %c0_9 = arith.constant 0 : index
    %c0_10 = arith.constant 0 : index
    %13 = vector.load %arg5[%c0_9, %c0_10] : memref<64x32xbf16, #tpu.memory_space<vmem>>, vector<64x32xbf16>
    %cst_11 = arith.constant dense<0.000000e+00> : vector<16x32xf32>
    %14 = tpu.matmul %12, %13, %cst_11 {dimension_numbers = #tpu.dot_dimension_numbers<[1], [0], [0], [1], [0, 0, 1, 1], [], []>} : vector<16x64xbf16>, vector<64x32xbf16>, vector<16x32xf32> -> vector<16x32xf32>
    %15 = arith.addf %11, %14 : vector<16x32xf32>
    %c0_12 = arith.constant 0 : index
    %c0_13 = arith.constant 0 : index
    %16 = vector.load %arg10[%c0_12, %c0_13] : memref<16x32xf32, #tpu.memory_space<vmem>>, vector<16x32xf32>
    tpu.vector_store %arg10[%c0_12, %c0_13], %15 {strides = array<i32>} : memref<16x32xf32, #tpu.memory_space<vmem>>, vector<16x32xf32>,
    %c0_i32_14 = arith.constant 0 : i32
    %17 = arith.cmpi eq, %arg1, %c0_i32_14 : i32
    %18 = arith.extui %17 : i1 to i32
    %c0_i32_15 = arith.constant 0 : i32
    %19 = arith.cmpi ne, %18, %c0_i32_15 : i32
    scf.if %19 {
      %c0_16 = arith.constant 0 : index
      %c0_17 = arith.constant 0 : index
      %20 = vector.load %arg10[%c0_16, %c0_17] : memref<16x32xf32, #tpu.memory_space<vmem>>, vector<16x32xf32>
      %c0_18 = arith.constant 0 : index
      %c0_19 = arith.constant 0 : index
      %21 = vector.load %arg6[%c0_18, %c0_19] : memref<1x32xf32, #tpu.memory_space<vmem>>, vector<1x32xf32>
      %22 = vector.broadcast %21 : vector<1x32xf32> to vector<16x32xf32>
      %23 = arith.addf %20, %22 : vector<16x32xf32>
      %24 = arith.extf %3 : vector<16x32xbf16> to vector<16x32xf32>
      %25 = arith.addf %23, %24 : vector<16x32xf32>
      %cst_20 = arith.constant dense<0.000000e+00> : vector<16xf32>
      %26 = vector.multi_reduction <add>, %25, %cst_20 [1] : vector<16x32xf32> to vector<16xf32>
      %27 = vector.shape_cast %26 : vector<16xf32> to vector<16x1xf32>
      %cst_21 = arith.constant 3.200000e+01 : f32
      %28 = vector.broadcast %cst_21 : f32 to vector<16x1xf32>
      %29 = arith.divf %27, %28 : vector<16x1xf32>
      %30 = vector.broadcast %29 : vector<16x1xf32> to vector<16x32xf32>
      %31 = arith.subf %25, %30 : vector<16x32xf32>
      %32 = arith.mulf %31, %31 : vector<16x32xf32>
      %cst_22 = arith.constant dense<0.000000e+00> : vector<16xf32>
      %33 = vector.multi_reduction <add>, %32, %cst_22 [1] : vector<16x32xf32> to vector<16xf32>
      %34 = vector.shape_cast %33 : vector<16xf32> to vector<16x1xf32>
      %cst_23 = arith.constant 3.200000e+01 : f32
      %35 = vector.broadcast %cst_23 : f32 to vector<16x1xf32>
      %36 = arith.divf %34, %35 : vector<16x1xf32>
      %cst_24 = arith.constant 9.99999974E-6 : f32
      %37 = vector.broadcast %cst_24 : f32 to vector<16x1xf32>
      %38 = arith.addf %36, %37 : vector<16x1xf32>
      %39 = math.rsqrt %38 : vector<16x1xf32>
      %40 = vector.broadcast %39 : vector<16x1xf32> to vector<16x32xf32>
      %41 = arith.mulf %31, %40 : vector<16x32xf32>
      %c0_25 = arith.constant 0 : index
      %c0_26 = arith.constant 0 : index
      %42 = vector.load %arg7[%c0_25, %c0_26] : memref<1x32xf32, #tpu.memory_space<vmem>>, vector<1x32xf32>
      %43 = vector.broadcast %42 : vector<1x32xf32> to vector<16x32xf32>
      %44 = arith.mulf %41, %43 : vector<16x32xf32>
      %c0_27 = arith.constant 0 : index
      %c0_28 = arith.constant 0 : index
      %45 = vector.load %arg8[%c0_27, %c0_28] : memref<1x32xf32, #tpu.memory_space<vmem>>, vector<1x32xf32>
      %46 = vector.broadcast %45 : vector<1x32xf32> to vector<16x32xf32>
      %47 = arith.addf %44, %46 : vector<16x32xf32>
      %48 = arith.truncf %47 : vector<16x32xf32> to vector<16x32xbf16>
      %c0_29 = arith.constant 0 : index
      %c0_30 = arith.constant 0 : index
      %49 = vector.load %arg9[%c0_29, %c0_30] : memref<16x32xbf16, #tpu.memory_space<vmem>>, vector<16x32xbf16>
      tpu.vector_store %arg9[%c0_29, %c0_30], %48 {strides = array<i32>} : memref<16x32xbf16, #tpu.memory_space<vmem>>, vector<16x32xbf16>,
    } else {
    }
    return
  }
  func.func @transform_0(%arg0: i32, %arg1: i32) -> (i32, i32) {
    %c0_i32 = arith.constant 0 : i32
    %c0_i32_0 = arith.constant 0 : i32
    return %arg0, %c0_i32 : i32, i32
  }
  func.func @transform_1(%arg0: i32, %arg1: i32) -> (i32, i32) {
    %c0_i32 = arith.constant 0 : i32
    %c0_i32_0 = arith.constant 0 : i32
    return %c0_i32, %arg1 : i32, i32
  }
  func.func @transform_2(%arg0: i32, %arg1: i32) -> (i32, i32) {
    %c0_i32 = arith.constant 0 : i32
    %c0_i32_0 = arith.constant 0 : i32
    return %c0_i32, %arg1 : i32, i32
  }
  func.func @transform_3(%arg0: i32, %arg1: i32) -> (i32, i32) {
    %c0_i32 = arith.constant 0 : i32
    %c0_i32_0 = arith.constant 0 : i32
    return %arg1, %c0_i32 : i32, i32
  }
  func.func @transform_4(%arg0: i32, %arg1: i32) -> (i32, i32) {
    %c0_i32 = arith.constant 0 : i32
    %c0_i32_0 = arith.constant 0 : i32
    %c0_i32_1 = arith.constant 0 : i32
    return %c0_i32, %c0_i32_0 : i32, i32
  }
  func.func @transform_5(%arg0: i32, %arg1: i32) -> (i32, i32) {
    %c0_i32 = arith.constant 0 : i32
    %c0_i32_0 = arith.constant 0 : i32
    %c0_i32_1 = arith.constant 0 : i32
    return %c0_i32, %c0_i32_0 : i32, i32
  }
  func.func @transform_6(%arg0: i32, %arg1: i32) -> (i32, i32) {
    %c0_i32 = arith.constant 0 : i32
    %c0_i32_0 = arith.constant 0 : i32
    %c0_i32_1 = arith.constant 0 : i32
    return %c0_i32, %c0_i32_0 : i32, i32
  }
  func.func @transform_7(%arg0: i32, %arg1: i32) -> (i32, i32) {
    %c0_i32 = arith.constant 0 : i32
    %c0_i32_0 = arith.constant 0 : i32
    return %arg0, %c0_i32 : i32, i32
  }
}

module attributes {stable_mosaic.version = 11 : i64} {
  func.func @_ffn_addnorm_kernel(%arg0: i32, %arg1: i32, %arg2: memref<16x32xbf16, #tpu.memory_space<vmem>>, %arg3: memref<32x64xbf16, #tpu.memory_space<vmem>>, %arg4: memref<1x64xf32, #tpu.memory_space<vmem>>, %arg5: memref<64x32xbf16, #tpu.memory_space<vmem>>, %arg6: memref<1x32xf32, #tpu.memory_space<vmem>>, %arg7: memref<1x32xf32, #tpu.memory_space<vmem>>, %arg8: memref<1x32xf32, #tpu.memory_space<vmem>>, %arg9: memref<16x32xbf16, #tpu.memory_space<vmem>>, %arg10: memref<16x32xf32, #tpu.memory_space<vmem>>) attributes {dimension_semantics = [#tpu.dimension_semantics<parallel>, #tpu.dimension_semantics<arbitrary>], iteration_bounds = array<i64: 1, 1>, scalar_prefetch = 0 : i64, scratch_operands = 1 : i64, tpu.core_type = #tpu.core_type<tc>, window_params = [{transform_indices = @transform_0, window_bounds = array<i64: 16, 32>}, {transform_indices = @transform_1, window_bounds = array<i64: 32, 64>}, {transform_indices = @transform_2, window_bounds = array<i64: 1, 64>}, {transform_indices = @transform_3, window_bounds = array<i64: 64, 32>}, {pipeline_mode = #tpu.pipeline_mode<synchronous>, transform_indices = @transform_4, window_bounds = array<i64: 1, 32>}, {pipeline_mode = #tpu.pipeline_mode<synchronous>, transform_indices = @transform_5, window_bounds = array<i64: 1, 32>}, {pipeline_mode = #tpu.pipeline_mode<synchronous>, transform_indices = @transform_6, window_bounds = array<i64: 1, 32>}, {transform_indices = @transform_7, window_bounds = array<i64: 16, 32>}]} {
    %c0_i32 = arith.constant 0 : i32
    %0 = arith.cmpi eq, %arg1, %c0_i32 : i32
    %1 = arith.extui %0 : i1 to i32
    %c0_i32_0 = arith.constant 0 : i32
    %2 = arith.cmpi ne, %1, %c0_i32_0 : i32
    scf.if %2 {
      %cst_16 = arith.constant 0.000000e+00 : f32
      %20 = vector.broadcast %cst_16 : f32 to vector<16x32xf32>
      %c0_17 = arith.constant 0 : index
      %c0_18 = arith.constant 0 : index
      %21 = vector.load %arg10[%c0_17, %c0_18] : memref<16x32xf32, #tpu.memory_space<vmem>>, vector<16x32xf32>
      tpu.vector_store %arg10[%c0_17, %c0_18], %20 {strides = array<i32>} : memref<16x32xf32, #tpu.memory_space<vmem>>, vector<16x32xf32>,
    } else {
    }
    %c0 = arith.constant 0 : index
    %c0_1 = arith.constant 0 : index
    %3 = vector.load %arg2[%c0, %c0_1] : memref<16x32xbf16, #tpu.memory_space<vmem>>, vector<16x32xbf16>
    %c0_2 = arith.constant 0 : index
    %c0_3 = arith.constant 0 : index
    %4 = vector.load %arg3[%c0_2, %c0_3] : memref<32x64xbf16, #tpu.memory_space<vmem>>, vector<32x64xbf16>
    %cst = arith.constant dense<0.000000e+00> : vector<16x64xf32>
    %5 = tpu.matmul %3, %4, %cst {dimension_numbers = #tpu.dot_dimension_numbers<[1], [0], [0], [1], [0, 0, 1, 1], [], []>} : vector<16x32xbf16>, vector<32x64xbf16>, vector<16x64xf32> -> vector<16x64xf32>
    %c0_4 = arith.constant 0 : index
    %c0_5 = arith.constant 0 : index
    %6 = vector.load %arg4[%c0_4, %c0_5] : memref<1x64xf32, #tpu.memory_space<vmem>>, vector<1x64xf32>
    %7 = vector.broadcast %6 : vector<1x64xf32> to vector<16x64xf32>
    %8 = arith.addf %5, %7 : vector<16x64xf32>
    %cst_6 = arith.constant 0.000000e+00 : f32
    %9 = vector.broadcast %cst_6 : f32 to vector<16x64xf32>
    %10 = arith.maximumf %8, %9 : vector<16x64xf32>
    %c0_7 = arith.constant 0 : index
    %c0_8 = arith.constant 0 : index
    %11 = vector.load %arg10[%c0_7, %c0_8] : memref<16x32xf32, #tpu.memory_space<vmem>>, vector<16x32xf32>
    %12 = arith.truncf %10 : vector<16x64xf32> to vector<16x64xbf16>
    %c0_9 = arith.constant 0 : index
    %c0_10 = arith.constant 0 : index
    %13 = vector.load %arg5[%c0_9, %c0_10] : memref<64x32xbf16, #tpu.memory_space<vmem>>, vector<64x32xbf16>
    %cst_11 = arith.constant dense<0.000000e+00> : vector<16x32xf32>
    %14 = tpu.matmul %12, %13, %cst_11 {dimension_numbers = #tpu.dot_dimension_numbers<[1], [0], [0], [1], [0, 0, 1, 1], [], []>} : vector<16x64xbf16>, vector<64x32xbf16>, vector<16x32xf32> -> vector<16x32xf32>
    %15 = arith.addf %11, %14 : vector<16x32xf32>
    %c0_12 = arith.constant 0 : index
    %c0_13 = arith.constant 0 : index
    %16 = vector.load %arg10[%c0_12, %c0_13] : memref<16x32xf32, #tpu.memory_space<vmem>>, vector<16x32xf32>
    tpu.vector_store %arg10[%c0_12, %c0_13], %15 {strides = array<i32>} : memref<16x32xf32, #tpu.memory_space<vmem>>, vector<16x32xf32>,
    %c0_i32_14 = arith.constant 0 : i32
    %17 = arith.cmpi eq, %arg1, %c0_i32_14 : i32
    %18 = arith.extui %17 : i1 to i32
    %c0_i32_15 = arith.constant 0 : i32
    %19 = arith.cmpi ne, %18, %c0_i32_15 : i32
    scf.if %19 {
      %c0_16 = arith.constant 0 : index
      %c0_17 = arith.constant 0 : index
      %20 = vector.load %arg10[%c0_16, %c0_17] : memref<16x32xf32, #tpu.memory_space<vmem>>, vector<16x32xf32>
      %c0_18 = arith.constant 0 : index
      %c0_19 = arith.constant 0 : index
      %21 = vector.load %arg6[%c0_18, %c0_19] : memref<1x32xf32, #tpu.memory_space<vmem>>, vector<1x32xf32>
      %22 = vector.broadcast %21 : vector<1x32xf32> to vector<16x32xf32>
      %23 = arith.addf %20, %22 : vector<16x32xf32>
      %24 = arith.extf %3 : vector<16x32xbf16> to vector<16x32xf32>
      %25 = arith.addf %23, %24 : vector<16x32xf32>
      %cst_20 = arith.constant dense<0.000000e+00> : vector<16xf32>
      %26 = vector.multi_reduction <add>, %25, %cst_20 [1] : vector<16x32xf32> to vector<16xf32>
      %27 = vector.shape_cast %26 : vector<16xf32> to vector<16x1xf32>
      %cst_21 = arith.constant 3.200000e+01 : f32
      %28 = vector.broadcast %cst_21 : f32 to vector<16x1xf32>
      %29 = arith.divf %27, %28 : vector<16x1xf32>
      %30 = vector.broadcast %29 : vector<16x1xf32> to vector<16x32xf32>
      %31 = arith.subf %25, %30 : vector<16x32xf32>
      %32 = arith.mulf %31, %31 : vector<16x32xf32>
      %cst_22 = arith.constant dense<0.000000e+00> : vector<16xf32>
      %33 = vector.multi_reduction <add>, %32, %cst_22 [1] : vector<16x32xf32> to vector<16xf32>
      %34 = vector.shape_cast %33 : vector<16xf32> to vector<16x1xf32>
      %cst_23 = arith.constant 3.200000e+01 : f32
      %35 = vector.broadcast %cst_23 : f32 to vector<16x1xf32>
      %36 = arith.divf %34, %35 : vector<16x1xf32>
      %cst_24 = arith.constant 9.99999974E-6 : f32
      %37 = vector.broadcast %cst_24 : f32 to vector<16x1xf32>
      %38 = arith.addf %36, %37 : vector<16x1xf32>
      %39 = math.rsqrt %38 : vector<16x1xf32>
      %40 = vector.broadcast %39 : vector<16x1xf32> to vector<16x32xf32>
      %41 = arith.mulf %31, %40 : vector<16x32xf32>
      %c0_25 = arith.constant 0 : index
      %c0_26 = arith.constant 0 : index
      %42 = vector.load %arg7[%c0_25, %c0_26] : memref<1x32xf32, #tpu.memory_space<vmem>>, vector<1x32xf32>
      %43 = vector.broadcast %42 : vector<1x32xf32> to vector<16x32xf32>
      %44 = arith.mulf %41, %43 : vector<16x32xf32>
      %c0_27 = arith.constant 0 : index
      %c0_28 = arith.constant 0 : index
      %45 = vector.load %arg8[%c0_27, %c0_28] : memref<1x32xf32, #tpu.memory_space<vmem>>, vector<1x32xf32>
      %46 = vector.broadcast %45 : vector<1x32xf32> to vector<16x32xf32>
      %47 = arith.addf %44, %46 : vector<16x32xf32>
      %48 = arith.truncf %47 : vector<16x32xf32> to vector<16x32xbf16>
      %c0_29 = arith.constant 0 : index
      %c0_30 = arith.constant 0 : index
      %49 = vector.load %arg9[%c0_29, %c0_30] : memref<16x32xbf16, #tpu.memory_space<vmem>>, vector<16x32xbf16>
      tpu.vector_store %arg9[%c0_29, %c0_30], %48 {strides = array<i32>} : memref<16x32xbf16, #tpu.memory_space<vmem>>, vector<16x32xbf16>,
    } else {
    }
    return
  }
  func.func @transform_0(%arg0: i32, %arg1: i32) -> (i32, i32) {
    %c0_i32 = arith.constant 0 : i32
    %c0_i32_0 = arith.constant 0 : i32
    return %arg0, %c0_i32 : i32, i32
  }
  func.func @transform_1(%arg0: i32, %arg1: i32) -> (i32, i32) {
    %c0_i32 = arith.constant 0 : i32
    %c0_i32_0 = arith.constant 0 : i32
    return %c0_i32, %arg1 : i32, i32
  }
  func.func @transform_2(%arg0: i32, %arg1: i32) -> (i32, i32) {
    %c0_i32 = arith.constant 0 : i32
    %c0_i32_0 = arith.constant 0 : i32
    return %c0_i32, %arg1 : i32, i32
  }
  func.func @transform_3(%arg0: i32, %arg1: i32) -> (i32, i32) {
    %c0_i32 = arith.constant 0 : i32
    %c0_i32_0 = arith.constant 0 : i32
    return %arg1, %c0_i32 : i32, i32
  }
  func.func @transform_4(%arg0: i32, %arg1: i32) -> (i32, i32) {
    %c0_i32 = arith.constant 0 : i32
    %c0_i32_0 = arith.constant 0 : i32
    %c0_i32_1 = arith.constant 0 : i32
    return %c0_i32, %c0_i32_0 : i32, i32
  }
  func.func @transform_5(%arg0: i32, %arg1: i32) -> (i32, i32) {
    %c0_i32 = arith.constant 0 : i32
    %c0_i32_0 = arith.constant 0 : i32
    %c0_i32_1 = arith.constant 0 : i32
    return %c0_i32, %c0_i32_0 : i32, i32
  }
  func.func @transform_6(%arg0: i32, %arg1: i32) -> (i32, i32) {
    %c0_i32 = arith.constant 0 : i32
    %c0_i32_0 = arith.constant 0 : i32
    %c0_i32_1 = arith.constant 0 : i32
    return %c0_i32, %c0_i32_0 : i32, i32
  }
  func.func @transform_7(%arg0: i32, %arg1: i32) -> (i32, i32) {
    %c0_i32 = arith.constant 0 : i32
    %c0_i32_0 = arith.constant 0 : i32
    return %arg0, %c0_i32 : i32, i32
  }
}

</mosaic_0001>

<llo_original>
// kernel: bert_encoder.8
$region0: #{bert_encoder.8}
  #allocation0 [shape = 'u32[]', space=smem, size = 0x4, offset = 0x4, fixed_abs, tag = 'smem constant byte address 0x4 - core index']
  #allocation1 [shape = 'u32[144,128]{1,0:T(1,128)}', space=vmem, size = 0x12000, scoped, tag = 'internal scratch']
  %s0 = inlined_call_operand.vmem [shape: bf16[16,32], index: 0, kind: input, shape index: {}]
  %s1 = inlined_call_operand.vmem [shape: bf16[32,96], index: 1, kind: input, shape index: {}]
  %s2 = inlined_call_operand.vmem [shape: f32[1,96], index: 2, kind: input, shape index: {}]
  %s3 = inlined_call_operand.vmem [shape: bf16[16,96], index: 3, kind: output, shape index: {}]
  %s4 = sld [smem:[#allocation0]]
  $region22: #{bert_encoder.8} parent=0
    _
  %s6 = ssub.s32 1, %s4
  %s7 = scalar_select 0, %s6, %s4
  // Predicated region
  $region2: #{bert_encoder.8} parent=0 // pred_check
    _
  $region3: #{bert_encoder.8} parent=0 // pred_check_branch
    %9 = sbr.rel (0) target = $region5
  $region4: #{bert_encoder.8} parent=0 // pred_region
    _
  $region5: #{bert_encoder.8} parent=0 // pred_fallthru
    _
  // Predicated region
  $region6: #{bert_encoder.8} parent=0 // pred_check
    _
  $region7: #{bert_encoder.8} parent=0 // pred_check_branch
    %11 = sbr.rel (0) target = $region9
  $region8: #{bert_encoder.8} parent=0 // pred_region
    _
  $region9: #{bert_encoder.8} parent=0 // pred_fallthru
    _
  // Predicated region
  $region10: #{bert_encoder.8} parent=0 // pred_check
    _
  $region11: #{bert_encoder.8} parent=0 // pred_check_branch
    %13 = sbr.rel (0) target = $region13
  $region12: #{bert_encoder.8} parent=0 // pred_region
    _
  $region13: #{bert_encoder.8} parent=0 // pred_fallthru
    _
  %v15 = vld [vmem:[%s0] sm:$0xf]
  %v16 = vld [vmem:[%s0 + $0x4] sm:$0xf]
  %v17 = vld [vmem:[%s1] sm:$0xf]
  %v18 = vld [vmem:[%s1 + $0x4] sm:$0xf]
  %v19 = vld [vmem:[%s1 + $0x8] sm:$0xf]
  %v20 = vld [vmem:[%s1 + $0xc] sm:$0xf]
  %v21 = vld [vmem:[%s2] sm:$0x1]
  %v23 = vlaneseq
  %v24 = vshrl.u32 %v23, 7
  %v25 = vsub.s32 0, %v24
  %v26 = vrot.slane %v21, %v25
  %v30 = vunpack.c.l.b16 %v15
  %v31 = vunpack.c.l.b16 %v16
  %v32 = vpack.c.b16 %v31, %v30
  %v37 = vunpack.c.l.b16 %v17
  %v38 = vunpack.c.l.b16 %v18
  %v39 = vunpack.c.l.b16 %v19
  %v40 = vunpack.c.l.b16 %v20
  %v41 = vpack.c.b16 %v38, %v37
  %v42 = vpack.c.b16 %v40, %v39
  %vm45 = vcmask 261120
  %v47 = vsel %vm45, %v32, 0
  %49 = vmatprep.subr.bf16.mxu0 0
  %50 = vmatpush1.bf16.msra.mxu0 0
  %51 = vmatprep.subr.bf16.mxu0 0
  %52 = vmatpush1.bf16.msra.mxu0 0
  %53 = vmatprep.subr.bf16.mxu0 0
  %54 = vmatpush1.bf16.msra.mxu0 0
  %55 = vmatprep.subr.bf16.mxu0 0
  %56 = vmatpush1.bf16.msra.mxu0 0
  %57 = vmatprep.subr.bf16.mxu0 0
  %58 = vmatpush1.bf16.msra.mxu0 0
  %59 = vmatprep.subr.bf16.mxu0 0
  %60 = vmatpush1.bf16.msra.mxu0 0
  %61 = vmatprep.subr.bf16.mxu0 0
  %62 = vmatpush1.bf16.msra.mxu0 %v42
  %63 = vmatprep.subr.bf16.mxu0 0
  %64 = vmatpush1.bf16.msra.mxu0 %v41
  %65 = vmatprep.subr.bf16.mxu0 0
  %66 = vmatpush2.bf16.msra.mxu0 0
  %67 = vmatprep.subr.bf16.mxu0 0
  %68 = vmatpush2.bf16.msra.mxu0 0
  %69 = vmatprep.subr.bf16.mxu0 0
  %70 = vmatpush2.bf16.msra.mxu0 0
  %71 = vmatprep.subr.bf16.mxu0 0
  %72 = vmatpush2.bf16.msra.mxu0 0
  %73 = vmatprep.subr.bf16.mxu0 0
  %74 = vmatpush2.bf16.msra.mxu0 0
  %75 = vmatprep.subr.bf16.mxu0 0
  %76 = vmatpush2.bf16.msra.mxu0 0
  %77 = vmatprep.subr.bf16.mxu0 0
  %78 = vmatpush2.bf16.msra.mxu0 0
  %79 = vmatprep.subr.bf16.mxu0 0
  %80 = vmatpush2.bf16.msra.mxu0 0
  %81 = vmatprep.mubr.bf16.mxu0 0
  %82 = vmatmul.mubr.bf16.gmra.mxu0 %v47
  %v83 = vpop.f32.mrf.mxu0
  %v84 = vadd.f32 %v26, %v83
  %v85 = vpop.f32.mrf.mxu0
  %v86 = vpop.f32.mrf.mxu0
  %v87 = vadd.f32 %v26, %v86
  %v88 = vpop.f32.mrf.mxu0
  %89 = vdwg.mxu0
  %v90 = vpack.c.bf16 %v87, %v84
  %v92 = vunpack.c.l.b16 %v90
  %v93 = vunpack.c.h.b16 %v90
  %v94 = vpack.c.b16 %v92, %v92
  %v95 = vpack.c.b16 %v93, %v93
  %vm98 = vcmask 781312
  %99 = vst.msk [vmem:[%s3] sm:$0xf] %vm98, %v94
  %100 = vst.msk [vmem:[%s3 + $0x4] sm:$0xf] %vm98, %v95
  // Predicated region
  $region14: #{bert_encoder.8} parent=0 // pred_check
    _
  $region15: #{bert_encoder.8} parent=0 // pred_check_branch
    %102 = sbr.rel (0) target = $region17
  $region16: #{bert_encoder.8} parent=0 // pred_region
    _
  $region17: #{bert_encoder.8} parent=0 // pred_fallthru
    _
  // Predicated region
  $region18: #{bert_encoder.8} parent=0 // pred_check
    _
  $region19: #{bert_encoder.8} parent=0 // pred_check_branch
    %104 = sbr.rel (0) target = $region21
  $region20: #{bert_encoder.8} parent=0 // pred_region
    _
  $region21: #{bert_encoder.8} parent=0 // pred_fallthru
    _

// kernel: bert_encoder.10
$region0: #{bert_encoder.10}
  #allocation0 [shape = 'u32[]', space=smem, size = 0x4, offset = 0x4, fixed_abs, tag = 'smem constant byte address 0x4 - core index']
  #allocation1 [shape = 'u32[144,128]{1,0:T(1,128)}', space=vmem, size = 0x12000, scoped, tag = 'internal scratch']
  %s0 = inlined_call_operand.vmem [shape: bf16[16,32], index: 0, kind: input, shape index: {}]
  %s1 = inlined_call_operand.vmem [shape: bf16[32,32], index: 1, kind: input, shape index: {}]
  %s2 = inlined_call_operand.vmem [shape: f32[1,32], index: 2, kind: input, shape index: {}]
  %s3 = inlined_call_operand.vmem [shape: bf16[16,32], index: 3, kind: input, shape index: {}]
  %s4 = inlined_call_operand.vmem [shape: f32[1,32], index: 4, kind: input, shape index: {}]
  %s5 = inlined_call_operand.vmem [shape: f32[1,32], index: 5, kind: input, shape index: {}]
  %s6 = inlined_call_operand.vmem [shape: bf16[16,32], index: 6, kind: output, shape index: {}]
  %s7 = sld [smem:[#allocation0]]
  $region34: #{bert_encoder.10} parent=0
    _
  %s9 = ssub.s32 1, %s7
  %s10 = scalar_select 0, %s9, %s7
  // Predicated region
  $region2: #{bert_encoder.10} parent=0 // pred_check
    _
  $region3: #{bert_encoder.10} parent=0 // pred_check_branch
    %12 = sbr.rel (0) target = $region5
  $region4: #{bert_encoder.10} parent=0 // pred_region
    _
  $region5: #{bert_encoder.10} parent=0 // pred_fallthru
    _
  // Predicated region
  $region6: #{bert_encoder.10} parent=0 // pred_check
    _
  $region7: #{bert_encoder.10} parent=0 // pred_check_branch
    %14 = sbr.rel (0) target = $region9
  $region8: #{bert_encoder.10} parent=0 // pred_region
    _
  $region9: #{bert_encoder.10} parent=0 // pred_fallthru
    _
  // Predicated region
  $region10: #{bert_encoder.10} parent=0 // pred_check
    _
  $region11: #{bert_encoder.10} parent=0 // pred_check_branch
    %16 = sbr.rel (0) target = $region13
  $region12: #{bert_encoder.10} parent=0 // pred_region
    _
  $region13: #{bert_encoder.10} parent=0 // pred_fallthru
    _
  // Predicated region
  $region14: #{bert_encoder.10} parent=0 // pred_check
    _
  $region15: #{bert_encoder.10} parent=0 // pred_check_branch
    %18 = sbr.rel (0) target = $region17
  $region16: #{bert_encoder.10} parent=0 // pred_region
    _
  $region17: #{bert_encoder.10} parent=0 // pred_fallthru
    _
  // Predicated region
  $region18: #{bert_encoder.10} parent=0 // pred_check
    _
  $region19: #{bert_encoder.10} parent=0 // pred_check_branch
    %20 = sbr.rel (0) target = $region21
  $region20: #{bert_encoder.10} parent=0 // pred_region
    _
  $region21: #{bert_encoder.10} parent=0 // pred_fallthru
    _
  // Predicated region
  $region22: #{bert_encoder.10} parent=0 // pred_check
    _
  $region23: #{bert_encoder.10} parent=0 // pred_check_branch
    %22 = sbr.rel (0) target = $region25
  $region24: #{bert_encoder.10} parent=0 // pred_region
    _
  $region25: #{bert_encoder.10} parent=0 // pred_fallthru
    _
  %v24 = vld [vmem:[%s0] sm:$0xf]
  %v25 = vld [vmem:[%s0 + $0x4] sm:$0xf]
  %v26 = vld [vmem:[%s1] sm:$0xf]
  %v27 = vld [vmem:[%s1 + $0x4] sm:$0xf]
  %v28 = vld [vmem:[%s1 + $0x8] sm:$0xf]
  %v29 = vld [vmem:[%s1 + $0xc] sm:$0xf]
  %v30 = vld [vmem:[%s2] sm:$0x1]
  %v32 = vlaneseq
  %v33 = vshrl.u32 %v32, 7
  %v34 = vsub.s32 0, %v33
  %v35 = vrot.slane %v30, %v34
  %v39 = vunpack.c.l.b16 %v24
  %v40 = vunpack.c.l.b16 %v25
  %v41 = vpack.c.b16 %v40, %v39
  %v46 = vunpack.c.l.b16 %v26
  %v47 = vunpack.c.l.b16 %v27
  %v48 = vunpack.c.l.b16 %v28
  %v49 = vunpack.c.l.b16 %v29
  %v50 = vpack.c.b16 %v47, %v46
  %v51 = vpack.c.b16 %v49, %v48
  %vm54 = vcmask 261120
  %v56 = vsel %vm54, %v41, 0
  %58 = vmatprep.subr.bf16.mxu0 0
  %59 = vmatpush1.bf16.msra.mxu0 0
  %60 = vmatprep.subr.bf16.mxu0 0
  %61 = vmatpush1.bf16.msra.mxu0 0
  %62 = vmatprep.subr.bf16.mxu0 0
  %63 = vmatpush1.bf16.msra.mxu0 0
  %64 = vmatprep.subr.bf16.mxu0 0
  %65 = vmatpush1.bf16.msra.mxu0 0
  %66 = vmatprep.subr.bf16.mxu0 0
  %67 = vmatpush1.bf16.msra.mxu0 0
  %68 = vmatprep.subr.bf16.mxu0 0
  %69 = vmatpush1.bf16.msra.mxu0 0
  %70 = vmatprep.subr.bf16.mxu0 0
  %71 = vmatpush1.bf16.msra.mxu0 %v51
  %72 = vmatprep.subr.bf16.mxu0 0
  %73 = vmatpush1.bf16.msra.mxu0 %v50
  %74 = vmatprep.subr.bf16.mxu0 0
  %75 = vmatpush2.bf16.msra.mxu0 0
  %76 = vmatprep.subr.bf16.mxu0 0
  %77 = vmatpush2.bf16.msra.mxu0 0
  %78 = vmatprep.subr.bf16.mxu0 0
  %79 = vmatpush2.bf16.msra.mxu0 0
  %80 = vmatprep.subr.bf16.mxu0 0
  %81 = vmatpush2.bf16.msra.mxu0 0
  %82 = vmatprep.subr.bf16.mxu0 0
  %83 = vmatpush2.bf16.msra.mxu0 0
  %84 = vmatprep.subr.bf16.mxu0 0
  %85 = vmatpush2.bf16.msra.mxu0 0
  %86 = vmatprep.subr.bf16.mxu0 0
  %87 = vmatpush2.bf16.msra.mxu0 0
  %88 = vmatprep.subr.bf16.mxu0 0
  %89 = vmatpush2.bf16.msra.mxu0 0
  %90 = vmatprep.mubr.bf16.mxu0 0
  %91 = vmatmul.mubr.bf16.gmra.mxu0 %v56
  %v92 = vpop.f32.mrf.mxu0
  %v93 = vadd.f32 %v35, %v92
  %v94 = vpop.f32.mrf.mxu0
  %v95 = vpop.f32.mrf.mxu0
  %v96 = vadd.f32 %v35, %v95
  %v97 = vpop.f32.mrf.mxu0
  %98 = vdwg.mxu0
  %v99 = vld [vmem:[%s3] sm:$0xf]
  %v100 = vld [vmem:[%s3 + $0x4] sm:$0xf]
  %v101 = vunpack.c.l.bf16 %v99
  %v102 = vunpack.c.l.bf16 %v100
  %v103 = vadd.f32 %v93, %v101
  %v104 = vadd.f32 %v96, %v102
  %v105 = vsel %vm54, %v103, 0.0
  %106 = vadd.xlane.f32.xlu0 %v105
  %v107 = vpop.xlane.xlu0 %106
  %v108 = vsel %vm54, %v104, 0.0
  %109 = vadd.xlane.f32.xlu0 %v108
  %v110 = vpop.xlane.xlu0 %109
  %v111 = vrcp.pop 32.0
  %v112 = vmul.f32 %v107, %v111
  %v113 = vmul.f32 %v110, %v111
  %v114 = vsub.f32 %v103, %v112
  %v115 = vsub.f32 %v104, %v113
  %v116 = vmul.f32 %v114, %v114
  %v117 = vmul.f32 %v115, %v115
  %v118 = vsel %vm54, %v116, 0.0
  %119 = vadd.xlane.f32.xlu0 %v118
  %v120 = vpop.xlane.xlu0 %119
  %v121 = vsel %vm54, %v117, 0.0
  %122 = vadd.xlane.f32.xlu0 %v121
  %v123 = vpop.xlane.xlu0 %122
  %v124 = vmul.f32 %v120, %v111
  %v125 = vmul.f32 %v123, %v111
  %v126 = vadd.f32 %v124, 1e-05
  %v127 = vadd.f32 %v125, 1e-05
  %v128 = vrsqrt.pop %v126
  %v129 = vrsqrt.pop %v127
  %v130 = vmul.f32 %v114, %v128
  %v131 = vmul.f32 %v115, %v129
  %v132 = vld [vmem:[%s4] sm:$0x1]
  %v134 = vlaneseq
  %v135 = vshrl.u32 %v134, 7
  %v136 = vsub.s32 0, %v135
  %v137 = vrot.slane %v132, %v136
  %v139 = vmul.f32 %v130, %v137
  %v140 = vmul.f32 %v131, %v137
  %v141 = vld [vmem:[%s5] sm:$0x1]
  %v143 = vlaneseq
  %v144 = vshrl.u32 %v143, 7
  %v145 = vsub.s32 0, %v144
  %v146 = vrot.slane %v141, %v145
  %v148 = vadd.f32 %v139, %v146
  %v149 = vadd.f32 %v140, %v146
  %v150 = vpack.c.bf16 %v149, %v148
  %v152 = vunpack.c.l.b16 %v150
  %v153 = vunpack.c.h.b16 %v150
  %v154 = vpack.c.b16 %v152, %v152
  %v155 = vpack.c.b16 %v153, %v153
  %vm158 = vcmask 257024
  %159 = vst.msk [vmem:[%s6] sm:$0xf] %vm158, %v154
  %160 = vst.msk [vmem:[%s6 + $0x4] sm:$0xf] %vm158, %v155
  // Predicated region
  $region26: #{bert_encoder.10} parent=0 // pred_check
    _
  $region27: #{bert_encoder.10} parent=0 // pred_check_branch
    %162 = sbr.rel (0) target = $region29
  $region28: #{bert_encoder.10} parent=0 // pred_region
    _
  $region29: #{bert_encoder.10} parent=0 // pred_fallthru
    _
  // Predicated region
  $region30: #{bert_encoder.10} parent=0 // pred_check
    _
  $region31: #{bert_encoder.10} parent=0 // pred_check_branch
    %164 = sbr.rel (0) target = $region33
  $region32: #{bert_encoder.10} parent=0 // pred_region
    _
  $region33: #{bert_encoder.10} parent=0 // pred_fallthru
    _

// kernel: bert_encoder.11
$region0: #{bert_encoder.11}
  #allocation0 [shape = 'u32[]', space=smem, size = 0x4, offset = 0x4, fixed_abs, tag = 'smem constant byte address 0x4 - core index']
  #allocation1 [shape = 'u32[144,128]{1,0:T(1,128)}', space=vmem, size = 0x12000, scoped, tag = 'internal scratch']
  #allocation2 [shape = 'f32[16,32]{1,0:T(8,128)}', space=vmem, size = 0x2000, scoped, tag = 'scratch operand']
  %s0 = inlined_call_operand.vmem [shape: bf16[16,32], index: 0, kind: input, shape index: {}]
  %s1 = inlined_call_operand.vmem [shape: bf16[32,64], index: 1, kind: input, shape index: {}]
  %s2 = inlined_call_operand.vmem [shape: f32[1,64], index: 2, kind: input, shape index: {}]
  %s3 = inlined_call_operand.vmem [shape: bf16[64,32], index: 3, kind: input, shape index: {}]
  %s4 = inlined_call_operand.vmem [shape: f32[1,32], index: 4, kind: input, shape index: {}]
  %s5 = inlined_call_operand.vmem [shape: f32[1,32], index: 5, kind: input, shape index: {}]
  %s6 = inlined_call_operand.vmem [shape: f32[1,32], index: 6, kind: input, shape index: {}]
  %s7 = inlined_call_operand.vmem [shape: bf16[16,32], index: 7, kind: output, shape index: {}]
  %s8 = sld [smem:[#allocation0]]
  $region46: #{bert_encoder.11} parent=0
    _
  %s10 = ssub.s32 1, %s8
  %s11 = scalar_select 0, %s10, %s8
  // Predicated region
  $region2: #{bert_encoder.11} parent=0 // pred_check
    _
  $region3: #{bert_encoder.11} parent=0 // pred_check_branch
    %13 = sbr.rel (0) target = $region5
  $region4: #{bert_encoder.11} parent=0 // pred_region
    _
  $region5: #{bert_encoder.11} parent=0 // pred_fallthru
    _
  // Predicated region
  $region6: #{bert_encoder.11} parent=0 // pred_check
    _
  $region7: #{bert_encoder.11} parent=0 // pred_check_branch
    %15 = sbr.rel (0) target = $region9
  $region8: #{bert_encoder.11} parent=0 // pred_region
    _
  $region9: #{bert_encoder.11} parent=0 // pred_fallthru
    _
  // Predicated region
  $region10: #{bert_encoder.11} parent=0 // pred_check
    _
  $region11: #{bert_encoder.11} parent=0 // pred_check_branch
    %17 = sbr.rel (0) target = $region13
  $region12: #{bert_encoder.11} parent=0 // pred_region
    _
  $region13: #{bert_encoder.11} parent=0 // pred_fallthru
    _
  // Predicated region
  $region14: #{bert_encoder.11} parent=0 // pred_check
    _
  $region15: #{bert_encoder.11} parent=0 // pred_check_branch
    %19 = sbr.rel (0) target = $region17
  $region16: #{bert_encoder.11} parent=0 // pred_region
    _
  $region17: #{bert_encoder.11} parent=0 // pred_fallthru
    _
  // Predicated region
  $region18: #{bert_encoder.11} parent=0 // pred_check
    _
  $region19: #{bert_encoder.11} parent=0 // pred_check_branch
    %21 = sbr.rel (0) target = $region21
  $region20: #{bert_encoder.11} parent=0 // pred_region
    _
  $region21: #{bert_encoder.11} parent=0 // pred_fallthru
    _
  // Predicated region
  $region22: #{bert_encoder.11} parent=0 // pred_check
    _
  $region23: #{bert_encoder.11} parent=0 // pred_check_branch
    %23 = sbr.rel (0) target = $region25
  $region24: #{bert_encoder.11} parent=0 // pred_region
    _
  $region25: #{bert_encoder.11} parent=0 // pred_fallthru
    _
  // Predicated region
  $region26: #{bert_encoder.11} parent=0 // pred_check
    _
  $region27: #{bert_encoder.11} parent=0 // pred_check_branch
    %25 = sbr.rel (0) target = $region29
  $region28: #{bert_encoder.11} parent=0 // pred_region
    _
  $region29: #{bert_encoder.11} parent=0 // pred_fallthru
    _
  %p27 = scmp.eq.s32.totalorder 0, 0
  // Predicated region
  $region30: #{bert_encoder.11} parent=0 // pred_check
    %p28 = pneg %p27
  $region31: #{bert_encoder.11} parent=0 // pred_check_branch
    %30 = sbr.rel (%p28) target = $region33
  $region32: #{bert_encoder.11} parent=0 // pred_region
    %vm31 = vcmask 261120
    %32 = vst.msk [vmem:[#allocation2] sm:$0xff] %vm31, 0.0
    %33 = vst.msk [vmem:[#allocation2 + $0x8] sm:$0xff] %vm31, 0.0
  $region33: #{bert_encoder.11} parent=0 // pred_fallthru
    _
  %v34 = vld [vmem:[%s0] sm:$0xf]
  %v35 = vld [vmem:[%s0 + $0x4] sm:$0xf]
  %v36 = vld [vmem:[%s1] sm:$0xf]
  %v37 = vld [vmem:[%s1 + $0x4] sm:$0xf]
  %v38 = vld [vmem:[%s1 + $0x8] sm:$0xf]
  %v39 = vld [vmem:[%s1 + $0xc] sm:$0xf]
  %v40 = vld [vmem:[%s2] sm:$0x1]
  %v42 = vlaneseq
  %v43 = vshrl.u32 %v42, 7
  %v44 = vsub.s32 0, %v43
  %v45 = vrot.slane %v40, %v44
  %v49 = vunpack.c.l.b16 %v34
  %v50 = vunpack.c.l.b16 %v35
  %v51 = vpack.c.b16 %v50, %v49
  %v56 = vunpack.c.l.b16 %v36
  %v57 = vunpack.c.l.b16 %v37
  %v58 = vunpack.c.l.b16 %v38
  %v59 = vunpack.c.l.b16 %v39
  %v60 = vpack.c.b16 %v57, %v56
  %v61 = vpack.c.b16 %v59, %v58
  %vm64 = vcmask 261120
  %v66 = vsel %vm64, %v51, 0
  %68 = vmatprep.subr.bf16.mxu0 0
  %69 = vmatpush1.bf16.msra.mxu0 0
  %70 = vmatprep.subr.bf16.mxu0 0
  %71 = vmatpush1.bf16.msra.mxu0 0
  %72 = vmatprep.subr.bf16.mxu0 0
  %73 = vmatpush1.bf16.msra.mxu0 0
  %74 = vmatprep.subr.bf16.mxu0 0
  %75 = vmatpush1.bf16.msra.mxu0 0
  %76 = vmatprep.subr.bf16.mxu0 0
  %77 = vmatpush1.bf16.msra.mxu0 0
  %78 = vmatprep.subr.bf16.mxu0 0
  %79 = vmatpush1.bf16.msra.mxu0 0
  %80 = vmatprep.subr.bf16.mxu0 0
  %81 = vmatpush1.bf16.msra.mxu0 %v61
  %82 = vmatprep.subr.bf16.mxu0 0
  %83 = vmatpush1.bf16.msra.mxu0 %v60
  %84 = vmatprep.subr.bf16.mxu0 0
  %85 = vmatpush2.bf16.msra.mxu0 0
  %86 = vmatprep.subr.bf16.mxu0 0
  %87 = vmatpush2.bf16.msra.mxu0 0
  %88 = vmatprep.subr.bf16.mxu0 0
  %89 = vmatpush2.bf16.msra.mxu0 0
  %90 = vmatprep.subr.bf16.mxu0 0
  %91 = vmatpush2.bf16.msra.mxu0 0
  %92 = vmatprep.subr.bf16.mxu0 0
  %93 = vmatpush2.bf16.msra.mxu0 0
  %94 = vmatprep.subr.bf16.mxu0 0
  %95 = vmatpush2.bf16.msra.mxu0 0
  %96 = vmatprep.subr.bf16.mxu0 0
  %97 = vmatpush2.bf16.msra.mxu0 0
  %98 = vmatprep.subr.bf16.mxu0 0
  %99 = vmatpush2.bf16.msra.mxu0 0
  %100 = vmatprep.mubr.bf16.mxu0 0
  %101 = vmatmul.mubr.bf16.gmra.mxu0 %v66
  %v102 = vpop.f32.mrf.mxu0
  %v103 = vadd.f32 %v45, %v102
  %v104 = vpop.f32.mrf.mxu0
  %v105 = vpop.f32.mrf.mxu0
  %v106 = vadd.f32 %v45, %v105
  %v107 = vpop.f32.mrf.mxu0
  %108 = vdwg.mxu0
  %v109 = vmax.f32 %v103, 0.0
  %v110 = vmax.f32 %v106, 0.0
  %v111 = vld [vmem:[#allocation2] sm:$0xff]
  %v112 = vld [vmem:[#allocation2 + $0x8] sm:$0xff]
  %v113 = vpack.c.bf16 %v110, %v109
  %v114 = vld [vmem:[%s3] sm:$0xf]
  %v115 = vld [vmem:[%s3 + $0x4] sm:$0xf]
  %v116 = vld [vmem:[%s3 + $0x8] sm:$0xf]
  %v117 = vld [vmem:[%s3 + $0xc] sm:$0xf]
  %v118 = vld [vmem:[%s3 + $0x10] sm:$0xf]
  %v119 = vld [vmem:[%s3 + $0x14] sm:$0xf]
  %v120 = vld [vmem:[%s3 + $0x18] sm:$0xf]
  %v121 = vld [vmem:[%s3 + $0x1c] sm:$0xf]
  %v130 = vunpack.c.l.b16 %v114
  %v131 = vunpack.c.l.b16 %v115
  %v132 = vunpack.c.l.b16 %v116
  %v133 = vunpack.c.l.b16 %v117
  %v134 = vunpack.c.l.b16 %v118
  %v135 = vunpack.c.l.b16 %v119
  %v136 = vunpack.c.l.b16 %v120
  %v137 = vunpack.c.l.b16 %v121
  %v138 = vpack.c.b16 %v131, %v130
  %v139 = vpack.c.b16 %v133, %v132
  %v140 = vpack.c.b16 %v135, %v134
  %v141 = vpack.c.b16 %v137, %v136
  %vm146 = vcmask 523264
  %v148 = vsel %vm146, %v113, 0
  %150 = vmatprep.subr.bf16.mxu0 0
  %151 = vmatpush1.bf16.msra.mxu0 0
  %152 = vmatprep.subr.bf16.mxu0 0
  %153 = vmatpush1.bf16.msra.mxu0 0
  %154 = vmatprep.subr.bf16.mxu0 0
  %155 = vmatpush1.bf16.msra.mxu0 0
  %156 = vmatprep.subr.bf16.mxu0 0
  %157 = vmatpush1.bf16.msra.mxu0 0
  %158 = vmatprep.subr.bf16.mxu0 0
  %159 = vmatpush1.bf16.msra.mxu0 %v141
  %160 = vmatprep.subr.bf16.mxu0 0
  %161 = vmatpush1.bf16.msra.mxu0 %v140
  %162 = vmatprep.subr.bf16.mxu0 0
  %163 = vmatpush1.bf16.msra.mxu0 %v139
  %164 = vmatprep.subr.bf16.mxu0 0
  %165 = vmatpush1.bf16.msra.mxu0 %v138
  %166 = vmatprep.subr.bf16.mxu0 0
  %167 = vmatpush2.bf16.msra.mxu0 0
  %168 = vmatprep.subr.bf16.mxu0 0
  %169 = vmatpush2.bf16.msra.mxu0 0
  %170 = vmatprep.subr.bf16.mxu0 0
  %171 = vmatpush2.bf16.msra.mxu0 0
  %172 = vmatprep.subr.bf16.mxu0 0
  %173 = vmatpush2.bf16.msra.mxu0 0
  %174 = vmatprep.subr.bf16.mxu0 0
  %175 = vmatpush2.bf16.msra.mxu0 0
  %176 = vmatprep.subr.bf16.mxu0 0
  %177 = vmatpush2.bf16.msra.mxu0 0
  %178 = vmatprep.subr.bf16.mxu0 0
  %179 = vmatpush2.bf16.msra.mxu0 0
  %180 = vmatprep.subr.bf16.mxu0 0
  %181 = vmatpush2.bf16.msra.mxu0 0
  %182 = vmatprep.mubr.bf16.mxu0 0
  %183 = vmatmul.mubr.bf16.gmra.mxu0 %v148
  %v184 = vpop.f32.mrf.mxu0
  %v185 = vadd.f32 0.0, %v184
  %v186 = vpop.f32.mrf.mxu0
  %v187 = vpop.f32.mrf.mxu0
  %v188 = vadd.f32 0.0, %v187
  %v189 = vpop.f32.mrf.mxu0
  %190 = vdwg.mxu0
  %v191 = vadd.f32 %v111, %v185
  %v192 = vadd.f32 %v112, %v188
  %193 = vst.msk [vmem:[#allocation2] sm:$0xff] %vm64, %v191
  %194 = vst.msk [vmem:[#allocation2 + $0x8] sm:$0xff] %vm64, %v192
  // Predicated region
  $region34: #{bert_encoder.11} parent=0 // pred_check
    %p195 = pneg %p27
  $region35: #{bert_encoder.11} parent=0 // pred_check_branch
    %197 = sbr.rel (%p195) target = $region37
  $region36: #{bert_encoder.11} parent=0 // pred_region
    %v198 = vld [vmem:[#allocation2] sm:$0xff]
    %v199 = vld [vmem:[#allocation2 + $0x8] sm:$0xff]
    %v200 = vld [vmem:[%s4] sm:$0x1]
    %v202 = vlaneseq
    %v203 = vshrl.u32 %v202, 7
    %v204 = vsub.s32 0, %v203
    %v205 = vrot.slane %v200, %v204
    %v207 = vadd.f32 %v198, %v205
    %v208 = vadd.f32 %v199, %v205
    %v209 = vunpack.c.l.bf16 %v34
    %v210 = vunpack.c.l.bf16 %v35
    %v211 = vadd.f32 %v207, %v209
    %v212 = vadd.f32 %v208, %v210
    %v213 = vsel %vm64, %v211, 0.0
    %214 = vadd.xlane.f32.xlu0 %v213
    %v215 = vpop.xlane.xlu0 %214
    %v216 = vsel %vm64, %v212, 0.0
    %217 = vadd.xlane.f32.xlu0 %v216
    %v218 = vpop.xlane.xlu0 %217
    %v219 = vrcp.pop 32.0
    %v220 = vmul.f32 %v215, %v219
    %v221 = vmul.f32 %v218, %v219
    %v222 = vsub.f32 %v211, %v220
    %v223 = vsub.f32 %v212, %v221
    %v224 = vmul.f32 %v222, %v222
    %v225 = vmul.f32 %v223, %v223
    %v226 = vsel %vm64, %v224, 0.0
    %227 = vadd.xlane.f32.xlu0 %v226
    %v228 = vpop.xlane.xlu0 %227
    %v229 = vsel %vm64, %v225, 0.0
    %230 = vadd.xlane.f32.xlu0 %v229
    %v231 = vpop.xlane.xlu0 %230
    %v232 = vmul.f32 %v228, %v219
    %v233 = vmul.f32 %v231, %v219
    %v234 = vadd.f32 %v232, 1e-05
    %v235 = vadd.f32 %v233, 1e-05
    %v236 = vrsqrt.pop %v234
    %v237 = vrsqrt.pop %v235
    %v238 = vmul.f32 %v222, %v236
    %v239 = vmul.f32 %v223, %v237
    %v240 = vld [vmem:[%s5] sm:$0x1]
    %v242 = vlaneseq
    %v243 = vshrl.u32 %v242, 7
    %v244 = vsub.s32 0, %v243
    %v245 = vrot.slane %v240, %v244
    %v247 = vmul.f32 %v238, %v245
    %v248 = vmul.f32 %v239, %v245
    %v249 = vld [vmem:[%s6] sm:$0x1]
    %v251 = vlaneseq
    %v252 = vshrl.u32 %v251, 7
    %v253 = vsub.s32 0, %v252
    %v254 = vrot.slane %v249, %v253
    %v256 = vadd.f32 %v247, %v254
    %v257 = vadd.f32 %v248, %v254
    %v258 = vpack.c.bf16 %v257, %v256
    %v260 = vunpack.c.l.b16 %v258
    %v261 = vunpack.c.h.b16 %v258
    %v262 = vpack.c.b16 %v260, %v260
    %v263 = vpack.c.b16 %v261, %v261
    %vm266 = vcmask 257024
    %267 = vst.msk [vmem:[%s7] sm:$0xf] %vm266, %v262
    %268 = vst.msk [vmem:[%s7 + $0x4] sm:$0xf] %vm266, %v263
  $region37: #{bert_encoder.11} parent=0 // pred_fallthru
    _
  // Predicated region
  $region38: #{bert_encoder.11} parent=0 // pred_check
    _
  $region39: #{bert_encoder.11} parent=0 // pred_check_branch
    %270 = sbr.rel (0) target = $region41
  $region40: #{bert_encoder.11} parent=0 // pred_region
    _
  $region41: #{bert_encoder.11} parent=0 // pred_fallthru
    _
  // Predicated region
  $region42: #{bert_encoder.11} parent=0 // pred_check
    _
  $region43: #{bert_encoder.11} parent=0 // pred_check_branch
    %272 = sbr.rel (0) target = $region45
  $region44: #{bert_encoder.11} parent=0 // pred_region
    _
  $region45: #{bert_encoder.11} parent=0 // pred_fallthru
    _

// kernel: bert_encoder.9
$region0: #{bert_encoder.9}
  #allocation0 [shape = 'u32[]', space=smem, size = 0x4, offset = 0x4, fixed_abs, tag = 'smem constant byte address 0x4 - core index']
  #allocation1 [shape = 'u32[144,128]{1,0:T(1,128)}', space=vmem, size = 0x12000, scoped, tag = 'internal scratch']
  #allocation2 [shape = 's32[1]{0}', space=sflag, size = 0x4, scoped, tag = 'scoped memory for bert_encoder.9']
  #allocation3 [shape = 'u8[512]{0}', space=smem, size = 0x200, scoped, tag = 'prefetched SMEM operand 0']
  %s0 = inlined_call_operand.vmem [shape: s32[2], index: 0, kind: input, shape index: {}]
  %s1 = inlined_call_operand.vmem [shape: bf16[2,8,96], index: 1, kind: input, shape index: {}]
  %s2 = inlined_call_operand.vmem [shape: bf16[2,8,32], index: 2, kind: output, shape index: {}]
  %s3 = sld [smem:[#allocation0]]
  $region37: #{bert_encoder.9} parent=0
    _
  %s5 = ssub.s32 1, %s3
  %s6 = scalar_select 0, %s5, %s3
  %s7 = sshll.u32 %s0, 4
  %s8 = int_to_ptr.vmem [resolvable:$true] %s7
  %10 = dma.vmem_to_smem %s8, 16, [#allocation3], [#allocation2]
  %11 = dma.done [#allocation2], 16
  %12 = sfence
  loop: start=0, step=1, limit=4
  $region2: #{bert_encoder.9} parent=0 // loop_pre_header
    _
  $region3: #{bert_encoder.9} parent=0 // loop_header
    %s14 = sphi 0, %s18
    %p15 = scmp.ge.s32.totalorder %s14, 4
    %s21 = sphi 0, %s33
    %s22 = sphi 0, %s29
    %s23 = sphi 0, %s21
    %s24 = sphi 0, %s22
    %s25 = sphi 0, %s23
    %s26 = sphi 0, %s24
    %s36 = sphi 0, %s38
    %s39 = sphi 0, %s36
    %s40 = sphi 0, %s39
    %s56 = sphi 0, %s40
    %s64 = sphi 0, %s66
    %s67 = sphi 0, %s64
    %s68 = sphi 0, %s67
    %s84 = sphi 0, %s68
  $region4: #{bert_encoder.9} parent=0 // loop_header_branch
    %17 = sbr.rel (%p15) target = $region8
  $region5: #{bert_encoder.9} parent=0 // loop_body
    %s19 = ssub.s32 %s14, 1
    %s20 = ssub.s32 %s14, 2
    %s27 = sadd.s32 1, %s22
    %p28 = scmp.ge.s32.totalorder %s27, 1
    %s29 = scalar_select %p28, 0, %s27
    %s30 = sadd.s32 1, %s21
    %s31 = scalar_select %p28, %s30, %s21
    %p32 = scmp.ge.s32.totalorder %s31, 2
    %s33 = scalar_select %p32, 0, %s31
    %s34 = ssub.s32 %s21, %s33
    %p35 = scmp.eq.s32.totalorder %s34, 0
    %s37 = sadd.s32 %s36, 1
    %s38 = scalar_select %p35, %s36, %s37
    %p41 = pneg %p35
    %p42 = scmp.eq.s32.totalorder %s14, 1
    %p43 = por %p41, %p42
    %p44 = scmp.ne.s32.totalorder %s36, %s39
    %p45 = scmp.eq.s32.totalorder %s14, 0
    %p46 = por %p44, %p45
    %p47 = scmp.ne.s32.totalorder %s36, %s39
    %p48 = scmp.eq.s32.totalorder %s19, 1
    %p49 = por %p47, %p48
    %p50 = scmp.ne.s32.totalorder %s39, %s40
    %p51 = scmp.eq.s32.totalorder %s19, 0
    %p52 = por %p50, %p51
    %p53 = scmp.ne.s32.totalorder %s39, %s40
    %p54 = scmp.eq.s32.totalorder %s20, 1
    %p55 = por %p53, %p54
    %p57 = scmp.ne.s32.totalorder %s40, %s56
    %p58 = scmp.eq.s32.totalorder %s20, 0
    %p59 = por %p57, %p58
    %s60 = ssub.s32 %s21, %s33
    %s61 = ssub.s32 %s22, %s29
    %s62 = sor.u32 %s60, %s61
    %p63 = scmp.eq.s32.totalorder %s62, 0
    %s65 = sadd.s32 %s64, 1
    %s66 = scalar_select %p63, %s64, %s65
    %p69 = pneg %p63
    %p70 = scmp.eq.s32.totalorder %s14, 1
    %p71 = por %p69, %p70
    %p72 = scmp.ne.s32.totalorder %s64, %s67
    %p73 = scmp.eq.s32.totalorder %s14, 0
    %p74 = por %p72, %p73
    %p75 = scmp.ne.s32.totalorder %s64, %s67
    %p76 = scmp.eq.s32.totalorder %s19, 1
    %p77 = por %p75, %p76
    %p78 = scmp.ne.s32.totalorder %s67, %s68
    %p79 = scmp.eq.s32.totalorder %s19, 0
    %p80 = por %p78, %p79
    %p81 = scmp.ne.s32.totalorder %s67, %s68
    %p82 = scmp.eq.s32.totalorder %s20, 1
    %p83 = por %p81, %p82
    %p85 = scmp.ne.s32.totalorder %s68, %s84
    %p86 = scmp.eq.s32.totalorder %s20, 0
    %p87 = por %p85, %p86
    %p88 = scmp.le.s32.totalorder 1, %s14
    %p89 = scmp.lt.s32.totalorder %s14, 3
    %p90 = pnand %p88, %p89
    %p91 = pneg %p90
    // Predicated region
    $region9: #{bert_encoder.9} parent=5 // pred_check
      _
    $region10: #{bert_encoder.9} parent=5 // pred_check_branch
      %93 = sbr.rel (%p90) target = $region12
    $region11: #{bert_encoder.9} parent=5 // pred_region
      %s94 = ssub.s32 %s14, 1
    $region12: #{bert_encoder.9} parent=5 // pred_fallthru
      _
    %p95 = scmp.lt.s32.totalorder %s14, 2
    // Predicated region
    $region13: #{bert_encoder.9} parent=5 // pred_check
      %p96 = pneg %p95
    $region14: #{bert_encoder.9} parent=5 // pred_check_branch
      %98 = sbr.rel (%p96) target = $region16
    $region15: #{bert_encoder.9} parent=5 // pred_region
      // Predicated region
      $region17: #{bert_encoder.9} parent=15 // pred_check
        %p99 = pneg %p46
      $region18: #{bert_encoder.9} parent=15 // pred_check_branch
        %101 = sbr.rel (%p99) target = $region20
      $region19: #{bert_encoder.9} parent=15 // pred_region
        %p102 = scmp.lt.s32.totalorder %s21, 1
        %s103 = scalar_select %p102, %s21, 1
        %s104 = smul.addr %s103, 4
        %s105 = scalar_lea.vmem %s1, %s104
      $region20: #{bert_encoder.9} parent=15 // pred_fallthru
        _
    $region16: #{bert_encoder.9} parent=5 // pred_fallthru
      _
    %p106 = scmp.le.s32.totalorder 1, %s14
    %p107 = scmp.lt.s32.totalorder %s14, 3
    %p108 = pnand %p106, %p107
    %p109 = pneg %p108
    // Predicated region
    $region21: #{bert_encoder.9} parent=5 // pred_check
      _
    $region22: #{bert_encoder.9} parent=5 // pred_check_branch
      %111 = sbr.rel (%p108) target = $region24
    $region23: #{bert_encoder.9} parent=5 // pred_region
      %s112 = ssub.s32 %s14, 1
      %p113 = scmp.lt.s32.totalorder %s23, 1
      %s114 = scalar_select %p113, %s23, 1
      %s115 = smul.addr %s114, 4
      %s116 = scalar_lea.vmem %s1, %s115
      %p117 = pneg %p52
      %p118 = pneg %p49
      %p119 = pneg %p80
      %p120 = pneg %p77
      %p121 = scmp.lt.s32.totalorder %s23, 1
      %s122 = scalar_select %p121, %s23, 1
      %p123 = scmp.lt.s32.totalorder %s24, 0
      %s124 = scalar_select %p123, %s24, 0
      %s125 = sadd.s32 %s124, %s122
      %s126 = smul.addr %s125, 4
      %s127 = scalar_lea.vmem %s2, %s126
      %p128 = scmp.lt.s32.totalorder %s23, 1
      %s129 = scalar_select %p128, %s23, 1
      %s130 = smul.addr %s129, 4
      %s131 = scalar_lea.vmem %s1, %s130
      %p132 = scmp.lt.s32.totalorder %s23, 1
      %s133 = scalar_select %p132, %s23, 1
      %p134 = scmp.lt.s32.totalorder %s24, 0
      %s135 = scalar_select %p134, %s24, 0
      %s136 = sadd.s32 %s135, %s133
      %s137 = smul.addr %s136, 4
      %s138 = scalar_lea.vmem %s2, %s137
      %s140 = sld [smem:[#allocation3 + %s23]]
      %s141 = smul.u32 %s24, 8
      %v142 = vlaneseq
      %v143 = vand.u32 %v142, 127
      %v144 = vstv %s140
      %vm145 = vcmp.lt.s32.totalorder %v143, %v144
      %s146 = sshra.s32 %s141, 3
      %s147 = sand.u32 %s141, 7
      %s148 = smul.addr %s146, 4
      %s149 = scalar_lea.vmem %s131, %s148
      %v150 = vld [vmem:[%s149] sm:$0xf]
      %v151 = vld [vmem:[%s131] sm:$0xf]
      %v153 = vunpack.c.l.b16 %v151
      %v154 = vpack.c.b16 %v153, %v153
      %155 = vrot.lane.b32.xlu0 %v154, 96
      %v156 = vpop.permute.xlu0 %155
      %vm157 = vcmask 64512
      %v159 = vsel %vm157, %v150, 0
      %v162 = vsel %vm157, %v156, 0
      %164 = vmatprep.subr.bf16.mxu0 0
      %165 = vmatpush1.bf16.xpose.msra.mxu0 0
      %166 = vmatprep.subr.bf16.mxu0 0
      %167 = vmatpush1.bf16.xpose.msra.mxu0 0
      %168 = vmatprep.subr.bf16.mxu0 0
      %169 = vmatpush1.bf16.xpose.msra.mxu0 0
      %170 = vmatprep.subr.bf16.mxu0 0
      %171 = vmatpush1.bf16.xpose.msra.mxu0 0
      %172 = vmatprep.subr.bf16.mxu0 0
      %173 = vmatpush1.bf16.xpose.msra.mxu0 0
      %174 = vmatprep.subr.bf16.mxu0 0
      %175 = vmatpush1.bf16.xpose.msra.mxu0 0
      %176 = vmatprep.subr.bf16.mxu0 0
      %177 = vmatpush1.bf16.xpose.msra.mxu0 0
      %178 = vmatprep.subr.bf16.mxu0 0
      %179 = vmatpush1.bf16.xpose.msra.mxu0 %v162
      %180 = vmatprep.subr.bf16.mxu0 0
      %181 = vmatpush2.bf16.xpose.msra.mxu0 0
      %182 = vmatprep.subr.bf16.mxu0 0
      %183 = vmatpush2.bf16.xpose.msra.mxu0 0
      %184 = vmatprep.subr.bf16.mxu0 0
      %185 = vmatpush2.bf16.xpose.msra.mxu0 0
      %186 = vmatprep.subr.bf16.mxu0 0
      %187 = vmatpush2.bf16.xpose.msra.mxu0 0
      %188 = vmatprep.subr.bf16.mxu0 0
      %189 = vmatpush2.bf16.xpose.msra.mxu0 0
      %190 = vmatprep.subr.bf16.mxu0 0
      %191 = vmatpush2.bf16.xpose.msra.mxu0 0
      %192 = vmatprep.subr.bf16.mxu0 0
      %193 = vmatpush2.bf16.xpose.msra.mxu0 0
      %194 = vmatprep.subr.bf16.mxu0 0
      %195 = vmatpush2.bf16.xpose.msra.mxu0 0
      %196 = vmatprep.mubr.bf16.mxu0 0
      %197 = vmatmul.mubr.bf16.gmra.mxu0 %v159
      %v198 = vpop.f32.mrf.mxu0
      %v199 = vadd.f32 0.0, %v198
      %v200 = vpop.f32.mrf.mxu0
      %v201 = vpop.f32.mrf.mxu0
      %v202 = vpop.f32.mrf.mxu0
      %203 = vdwg.mxu0
      %v204 = vmul.f32 %v199, 0.35355338
      %v205 = vsel %vm145, %v204, -1000000.0
      %v206 = vsel %vm157, %v205, -inf
      %207 = vmax.xlane.f32.xlu0 %v206
      %v208 = vpop.xlane.xlu0 %207
      %v209 = vsub.f32 %v205, %v208
      %v210 = vmul.f32 %v209, 1.442695
      %v211 = vpow.pop %v210
      %v212 = vsel %vm157, %v211, 0.0
      %213 = vadd.xlane.f32.xlu0 %v212
      %v214 = vpop.xlane.xlu0 %213
      %v215 = vrcp.pop %v214
      %v216 = vmul.f32 %v211, %v215
      %v217 = vpack.c.bf16 %v216, %v216
      %218 = vrot.lane.b32.xlu0 %v154, 64
      %v219 = vpop.permute.xlu0 %218
      %v221 = vsel %vm157, %v217, 0
      %vm223 = vcmask 1043456
      %v225 = vsel %vm223, %v219, 0
      %227 = vmatprep.subr.bf16.mxu0 0
      %228 = vmatpush1.bf16.msra.mxu0 0
      %229 = vmatprep.subr.bf16.mxu0 0
      %230 = vmatpush1.bf16.msra.mxu0 0
      %231 = vmatprep.subr.bf16.mxu0 0
      %232 = vmatpush1.bf16.msra.mxu0 0
      %233 = vmatprep.subr.bf16.mxu0 0
      %234 = vmatpush1.bf16.msra.mxu0 0
      %235 = vmatprep.subr.bf16.mxu0 0
      %236 = vmatpush1.bf16.msra.mxu0 0
      %237 = vmatprep.subr.bf16.mxu0 0
      %238 = vmatpush1.bf16.msra.mxu0 0
      %239 = vmatprep.subr.bf16.mxu0 0
      %240 = vmatpush1.bf16.msra.mxu0 0
      %241 = vmatprep.subr.bf16.mxu0 0
      %242 = vmatpush1.bf16.msra.mxu0 %v225
      %243 = vmatprep.subr.bf16.mxu0 0
      %244 = vmatpush2.bf16.msra.mxu0 0
      %245 = vmatprep.subr.bf16.mxu0 0
      %246 = vmatpush2.bf16.msra.mxu0 0
      %247 = vmatprep.subr.bf16.mxu0 0
      %248 = vmatpush2.bf16.msra.mxu0 0
      %249 = vmatprep.subr.bf16.mxu0 0
      %250 = vmatpush2.bf16.msra.mxu0 0
      %251 = vmatprep.subr.bf16.mxu0 0
      %252 = vmatpush2.bf16.msra.mxu0 0
      %253 = vmatprep.subr.bf16.mxu0 0
      %254 = vmatpush2.bf16.msra.mxu0 0
      %255 = vmatprep.subr.bf16.mxu0 0
      %256 = vmatpush2.bf16.msra.mxu0 0
      %257 = vmatprep.subr.bf16.mxu0 0
      %258 = vmatpush2.bf16.msra.mxu0 0
      %259 = vmatprep.mubr.bf16.mxu0 0
      %260 = vmatmul.mubr.bf16.gmra.mxu0 %v221
      %v261 = vpop.f32.mrf.mxu0
      %v262 = vadd.f32 0.0, %v261
      %v263 = vpop.f32.mrf.mxu0
      %v264 = vpop.f32.mrf.mxu0
      %v265 = vpop.f32.mrf.mxu0
      %266 = vdwg.mxu0
      %v268 = vunpack.c.l.b16 %v150
      %v269 = vpack.c.b16 %v268, %v268
      %270 = vrot.lane.b32.xlu0 %v269, 120
      %v271 = vpop.permute.xlu0 %270
      %272 = vrot.lane.b32.xlu0 %v154, 88
      %v273 = vpop.permute.xlu0 %272
      %v275 = vsel %vm157, %v271, 0
      %v278 = vsel %vm157, %v273, 0
      %280 = vmatprep.subr.bf16.mxu0 0
      %281 = vmatpush1.bf16.xpose.msra.mxu0 0
      %282 = vmatprep.subr.bf16.mxu0 0
      %283 = vmatpush1.bf16.xpose.msra.mxu0 0
      %284 = vmatprep.subr.bf16.mxu0 0
      %285 = vmatpush1.bf16.xpose.msra.mxu0 0
      %286 = vmatprep.subr.bf16.mxu0 0
      %287 = vmatpush1.bf16.xpose.msra.mxu0 0
      %288 = vmatprep.subr.bf16.mxu0 0
      %289 = vmatpush1.bf16.xpose.msra.mxu0 0
      %290 = vmatprep.subr.bf16.mxu0 0
      %291 = vmatpush1.bf16.xpose.msra.mxu0 0
      %292 = vmatprep.subr.bf16.mxu0 0
      %293 = vmatpush1.bf16.xpose.msra.mxu0 0
      %294 = vmatprep.subr.bf16.mxu0 0
      %295 = vmatpush1.bf16.xpose.msra.mxu0 %v278
      %296 = vmatprep.subr.bf16.mxu0 0
      %297 = vmatpush2.bf16.xpose.msra.mxu0 0
      %298 = vmatprep.subr.bf16.mxu0 0
      %299 = vmatpush2.bf16.xpose.msra.mxu0 0
      %300 = vmatprep.subr.bf16.mxu0 0
      %301 = vmatpush2.bf16.xpose.msra.mxu0 0
      %302 = vmatprep.subr.bf16.mxu0 0
      %303 = vmatpush2.bf16.xpose.msra.mxu0 0
      %304 = vmatprep.subr.bf16.mxu0 0
      %305 = vmatpush2.bf16.xpose.msra.mxu0 0
      %306 = vmatprep.subr.bf16.mxu0 0
      %307 = vmatpush2.bf16.xpose.msra.mxu0 0
      %308 = vmatprep.subr.bf16.mxu0 0
      %309 = vmatpush2.bf16.xpose.msra.mxu0 0
      %310 = vmatprep.subr.bf16.mxu0 0
      %311 = vmatpush2.bf16.xpose.msra.mxu0 0
      %312 = vmatprep.mubr.bf16.mxu0 0
      %313 = vmatmul.mubr.bf16.gmra.mxu0 %v275
      %v314 = vpop.f32.mrf.mxu0
      %v315 = vadd.f32 0.0, %v314
      %v316 = vpop.f32.mrf.mxu0
      %v317 = vpop.f32.mrf.mxu0
      %v318 = vpop.f32.mrf.mxu0
      %319 = vdwg.mxu0
      %v320 = vmul.f32 %v315, 0.35355338
      %v321 = vsel %vm145, %v320, -1000000.0
      %v322 = vsel %vm157, %v321, -inf
      %323 = vmax.xlane.f32.xlu0 %v322
      %v324 = vpop.xlane.xlu0 %323
      %v325 = vsub.f32 %v321, %v324
      %v326 = vmul.f32 %v325, 1.442695
      %v327 = vpow.pop %v326
      %v328 = vsel %vm157, %v327, 0.0
      %329 = vadd.xlane.f32.xlu0 %v328
      %v330 = vpop.xlane.xlu0 %329
      %v331 = vrcp.pop %v330
      %v332 = vmul.f32 %v327, %v331
      %v333 = vpack.c.bf16 %v332, %v332
      %334 = vrot.lane.b32.xlu0 %v154, 56
      %v335 = vpop.permute.xlu0 %334
      %v337 = vsel %vm157, %v333, 0
      %v340 = vsel %vm223, %v335, 0
      %342 = vmatprep.subr.bf16.mxu0 0
      %343 = vmatpush1.bf16.msra.mxu0 0
      %344 = vmatprep.subr.bf16.mxu0 0
      %345 = vmatpush1.bf16.msra.mxu0 0
      %346 = vmatprep.subr.bf16.mxu0 0
      %347 = vmatpush1.bf16.msra.mxu0 0
      %348 = vmatprep.subr.bf16.mxu0 0
      %349 = vmatpush1.bf16.msra.mxu0 0
      %350 = vmatprep.subr.bf16.mxu0 0
      %351 = vmatpush1.bf16.msra.mxu0 0
      %352 = vmatprep.subr.bf16.mxu0 0
      %353 = vmatpush1.bf16.msra.mxu0 0
      %354 = vmatprep.subr.bf16.mxu0 0
      %355 = vmatpush1.bf16.msra.mxu0 0
      %356 = vmatprep.subr.bf16.mxu0 0
      %357 = vmatpush1.bf16.msra.mxu0 %v340
      %358 = vmatprep.subr.bf16.mxu0 0
      %359 = vmatpush2.bf16.msra.mxu0 0
      %360 = vmatprep.subr.bf16.mxu0 0
      %361 = vmatpush2.bf16.msra.mxu0 0
      %362 = vmatprep.subr.bf16.mxu0 0
      %363 = vmatpush2.bf16.msra.mxu0 0
      %364 = vmatprep.subr.bf16.mxu0 0
      %365 = vmatpush2.bf16.msra.mxu0 0
      %366 = vmatprep.subr.bf16.mxu0 0
      %367 = vmatpush2.bf16.msra.mxu0 0
      %368 = vmatprep.subr.bf16.mxu0 0
      %369 = vmatpush2.bf16.msra.mxu0 0
      %370 = vmatprep.subr.bf16.mxu0 0
      %371 = vmatpush2.bf16.msra.mxu0 0
      %372 = vmatprep.subr.bf16.mxu0 0
      %373 = vmatpush2.bf16.msra.mxu0 0
      %374 = vmatprep.mubr.bf16.mxu0 0
      %375 = vmatmul.mubr.bf16.gmra.mxu0 %v337
      %v376 = vpop.f32.mrf.mxu0
      %v377 = vadd.f32 0.0, %v376
      %v378 = vpop.f32.mrf.mxu0
      %v379 = vpop.f32.mrf.mxu0
      %v380 = vpop.f32.mrf.mxu0
      %381 = vdwg.mxu0
      %382 = vrot.lane.b32.xlu0 %v269, 112
      %v383 = vpop.permute.xlu0 %382
      %384 = vrot.lane.b32.xlu0 %v154, 80
      %v385 = vpop.permute.xlu0 %384
      %v387 = vsel %vm157, %v383, 0
      %v390 = vsel %vm157, %v385, 0
      %392 = vmatprep.subr.bf16.mxu0 0
      %393 = vmatpush1.bf16.xpose.msra.mxu0 0
      %394 = vmatprep.subr.bf16.mxu0 0
      %395 = vmatpush1.bf16.xpose.msra.mxu0 0
      %396 = vmatprep.subr.bf16.mxu0 0
      %397 = vmatpush1.bf16.xpose.msra.mxu0 0
      %398 = vmatprep.subr.bf16.mxu0 0
      %399 = vmatpush1.bf16.xpose.msra.mxu0 0
      %400 = vmatprep.subr.bf16.mxu0 0
      %401 = vmatpush1.bf16.xpose.msra.mxu0 0
      %402 = vmatprep.subr.bf16.mxu0 0
      %403 = vmatpush1.bf16.xpose.msra.mxu0 0
      %404 = vmatprep.subr.bf16.mxu0 0
      %405 = vmatpush1.bf16.xpose.msra.mxu0 0
      %406 = vmatprep.subr.bf16.mxu0 0
      %407 = vmatpush1.bf16.xpose.msra.mxu0 %v390
      %408 = vmatprep.subr.bf16.mxu0 0
      %409 = vmatpush2.bf16.xpose.msra.mxu0 0
      %410 = vmatprep.subr.bf16.mxu0 0
      %411 = vmatpush2.bf16.xpose.msra.mxu0 0
      %412 = vmatprep.subr.bf16.mxu0 0
      %413 = vmatpush2.bf16.xpose.msra.mxu0 0
      %414 = vmatprep.subr.bf16.mxu0 0
      %415 = vmatpush2.bf16.xpose.msra.mxu0 0
      %416 = vmatprep.subr.bf16.mxu0 0
      %417 = vmatpush2.bf16.xpose.msra.mxu0 0
      %418 = vmatprep.subr.bf16.mxu0 0
      %419 = vmatpush2.bf16.xpose.msra.mxu0 0
      %420 = vmatprep.subr.bf16.mxu0 0
      %421 = vmatpush2.bf16.xpose.msra.mxu0 0
      %422 = vmatprep.subr.bf16.mxu0 0
      %423 = vmatpush2.bf16.xpose.msra.mxu0 0
      %424 = vmatprep.mubr.bf16.mxu0 0
      %425 = vmatmul.mubr.bf16.gmra.mxu0 %v387
      %v426 = vpop.f32.mrf.mxu0
      %v427 = vadd.f32 0.0, %v426
      %v428 = vpop.f32.mrf.mxu0
      %v429 = vpop.f32.mrf.mxu0
      %v430 = vpop.f32.mrf.mxu0
      %431 = vdwg.mxu0
      %v432 = vmul.f32 %v427, 0.35355338
      %v433 = vsel %vm145, %v432, -1000000.0
      %v434 = vsel %vm157, %v433, -inf
      %435 = vmax.xlane.f32.xlu0 %v434
      %v436 = vpop.xlane.xlu0 %435
      %v437 = vsub.f32 %v433, %v436
      %v438 = vmul.f32 %v437, 1.442695
      %v439 = vpow.pop %v438
      %v440 = vsel %vm157, %v439, 0.0
      %441 = vadd.xlane.f32.xlu0 %v440
      %v442 = vpop.xlane.xlu0 %441
      %v443 = vrcp.pop %v442
      %v444 = vmul.f32 %v439, %v443
      %v445 = vpack.c.bf16 %v444, %v444
      %446 = vrot.lane.b32.xlu0 %v154, 48
      %v447 = vpop.permute.xlu0 %446
      %v449 = vsel %vm157, %v445, 0
      %v452 = vsel %vm223, %v447, 0
      %454 = vmatprep.subr.bf16.mxu0 0
      %455 = vmatpush1.bf16.msra.mxu0 0
      %456 = vmatprep.subr.bf16.mxu0 0
      %457 = vmatpush1.bf16.msra.mxu0 0
      %458 = vmatprep.subr.bf16.mxu0 0
      %459 = vmatpush1.bf16.msra.mxu0 0
      %460 = vmatprep.subr.bf16.mxu0 0
      %461 = vmatpush1.bf16.msra.mxu0 0
      %462 = vmatprep.subr.bf16.mxu0 0
      %463 = vmatpush1.bf16.msra.mxu0 0
      %464 = vmatprep.subr.bf16.mxu0 0
      %465 = vmatpush1.bf16.msra.mxu0 0
      %466 = vmatprep.subr.bf16.mxu0 0
      %467 = vmatpush1.bf16.msra.mxu0 0
      %468 = vmatprep.subr.bf16.mxu0 0
      %469 = vmatpush1.bf16.msra.mxu0 %v452
      %470 = vmatprep.subr.bf16.mxu0 0
      %471 = vmatpush2.bf16.msra.mxu0 0
      %472 = vmatprep.subr.bf16.mxu0 0
      %473 = vmatpush2.bf16.msra.mxu0 0
      %474 = vmatprep.subr.bf16.mxu0 0
      %475 = vmatpush2.bf16.msra.mxu0 0
      %476 = vmatprep.subr.bf16.mxu0 0
      %477 = vmatpush2.bf16.msra.mxu0 0
      %478 = vmatprep.subr.bf16.mxu0 0
      %479 = vmatpush2.bf16.msra.mxu0 0
      %480 = vmatprep.subr.bf16.mxu0 0
      %481 = vmatpush2.bf16.msra.mxu0 0
      %482 = vmatprep.subr.bf16.mxu0 0
      %483 = vmatpush2.bf16.msra.mxu0 0
      %484 = vmatprep.subr.bf16.mxu0 0
      %485 = vmatpush2.bf16.msra.mxu0 0
      %486 = vmatprep.mubr.bf16.mxu0 0
      %487 = vmatmul.mubr.bf16.gmra.mxu0 %v449
      %v488 = vpop.f32.mrf.mxu0
      %v489 = vadd.f32 0.0, %v488
      %v490 = vpop.f32.mrf.mxu0
      %v491 = vpop.f32.mrf.mxu0
      %v492 = vpop.f32.mrf.mxu0
      %493 = vdwg.mxu0
      %494 = vrot.lane.b32.xlu0 %v269, 104
      %v495 = vpop.permute.xlu0 %494
      %496 = vrot.lane.b32.xlu0 %v154, 72
      %v497 = vpop.permute.xlu0 %496
      %v499 = vsel %vm157, %v495, 0
      %v502 = vsel %vm157, %v497, 0
      %504 = vmatprep.subr.bf16.mxu0 0
      %505 = vmatpush1.bf16.xpose.msra.mxu0 0
      %506 = vmatprep.subr.bf16.mxu0 0
      %507 = vmatpush1.bf16.xpose.msra.mxu0 0
      %508 = vmatprep.subr.bf16.mxu0 0
      %509 = vmatpush1.bf16.xpose.msra.mxu0 0
      %510 = vmatprep.subr.bf16.mxu0 0
      %511 = vmatpush1.bf16.xpose.msra.mxu0 0
      %512 = vmatprep.subr.bf16.mxu0 0
      %513 = vmatpush1.bf16.xpose.msra.mxu0 0
      %514 = vmatprep.subr.bf16.mxu0 0
      %515 = vmatpush1.bf16.xpose.msra.mxu0 0
      %516 = vmatprep.subr.bf16.mxu0 0
      %517 = vmatpush1.bf16.xpose.msra.mxu0 0
      %518 = vmatprep.subr.bf16.mxu0 0
      %519 = vmatpush1.bf16.xpose.msra.mxu0 %v502
      %520 = vmatprep.subr.bf16.mxu0 0
      %521 = vmatpush2.bf16.xpose.msra.mxu0 0
      %522 = vmatprep.subr.bf16.mxu0 0
      %523 = vmatpush2.bf16.xpose.msra.mxu0 0
      %524 = vmatprep.subr.bf16.mxu0 0
      %525 = vmatpush2.bf16.xpose.msra.mxu0 0
      %526 = vmatprep.subr.bf16.mxu0 0
      %527 = vmatpush2.bf16.xpose.msra.mxu0 0
      %528 = vmatprep.subr.bf16.mxu0 0
      %529 = vmatpush2.bf16.xpose.msra.mxu0 0
      %530 = vmatprep.subr.bf16.mxu0 0
      %531 = vmatpush2.bf16.xpose.msra.mxu0 0
      %532 = vmatprep.subr.bf16.mxu0 0
      %533 = vmatpush2.bf16.xpose.msra.mxu0 0
      %534 = vmatprep.subr.bf16.mxu0 0
      %535 = vmatpush2.bf16.xpose.msra.mxu0 0
      %536 = vmatprep.mubr.bf16.mxu0 0
      %537 = vmatmul.mubr.bf16.gmra.mxu0 %v499
      %v538 = vpop.f32.mrf.mxu0
      %v539 = vadd.f32 0.0, %v538
      %v540 = vpop.f32.mrf.mxu0
      %v541 = vpop.f32.mrf.mxu0
      %v542 = vpop.f32.mrf.mxu0
      %543 = vdwg.mxu0
      %v544 = vmul.f32 %v539, 0.35355338
      %v545 = vsel %vm145, %v544, -1000000.0
      %v546 = vsel %vm157, %v545, -inf
      %547 = vmax.xlane.f32.xlu0 %v546
      %v548 = vpop.xlane.xlu0 %547
      %v549 = vsub.f32 %v545, %v548
      %v550 = vmul.f32 %v549, 1.442695
      %v551 = vpow.pop %v550
      %v552 = vsel %vm157, %v551, 0.0
      %553 = vadd.xlane.f32.xlu0 %v552
      %v554 = vpop.xlane.xlu0 %553
      %v555 = vrcp.pop %v554
      %v556 = vmul.f32 %v551, %v555
      %v557 = vpack.c.bf16 %v556, %v556
      %558 = vrot.lane.b32.xlu0 %v154, 40
      %v559 = vpop.permute.xlu0 %558
      %v561 = vsel %vm157, %v557, 0
      %v564 = vsel %vm223, %v559, 0
      %566 = vmatprep.subr.bf16.mxu0 0
      %567 = vmatpush1.bf16.msra.mxu0 0
      %568 = vmatprep.subr.bf16.mxu0 0
      %569 = vmatpush1.bf16.msra.mxu0 0
      %570 = vmatprep.subr.bf16.mxu0 0
      %571 = vmatpush1.bf16.msra.mxu0 0
      %572 = vmatprep.subr.bf16.mxu0 0
      %573 = vmatpush1.bf16.msra.mxu0 0
      %574 = vmatprep.subr.bf16.mxu0 0
      %575 = vmatpush1.bf16.msra.mxu0 0
      %576 = vmatprep.subr.bf16.mxu0 0
      %577 = vmatpush1.bf16.msra.mxu0 0
      %578 = vmatprep.subr.bf16.mxu0 0
      %579 = vmatpush1.bf16.msra.mxu0 0
      %580 = vmatprep.subr.bf16.mxu0 0
      %581 = vmatpush1.bf16.msra.mxu0 %v564
      %582 = vmatprep.subr.bf16.mxu0 0
      %583 = vmatpush2.bf16.msra.mxu0 0
      %584 = vmatprep.subr.bf16.mxu0 0
      %585 = vmatpush2.bf16.msra.mxu0 0
      %586 = vmatprep.subr.bf16.mxu0 0
      %587 = vmatpush2.bf16.msra.mxu0 0
      %588 = vmatprep.subr.bf16.mxu0 0
      %589 = vmatpush2.bf16.msra.mxu0 0
      %590 = vmatprep.subr.bf16.mxu0 0
      %591 = vmatpush2.bf16.msra.mxu0 0
      %592 = vmatprep.subr.bf16.mxu0 0
      %593 = vmatpush2.bf16.msra.mxu0 0
      %594 = vmatprep.subr.bf16.mxu0 0
      %595 = vmatpush2.bf16.msra.mxu0 0
      %596 = vmatprep.subr.bf16.mxu0 0
      %597 = vmatpush2.bf16.msra.mxu0 0
      %598 = vmatprep.mubr.bf16.mxu0 0
      %599 = vmatmul.mubr.bf16.gmra.mxu0 %v561
      %v600 = vpop.f32.mrf.mxu0
      %v601 = vadd.f32 0.0, %v600
      %v602 = vpop.f32.mrf.mxu0
      %v603 = vpop.f32.mrf.mxu0
      %v604 = vpop.f32.mrf.mxu0
      %605 = vdwg.mxu0
      %607 = vrot.lane.b32.xlu0 %v377, 8
      %v608 = vpop.permute.xlu0 %607
      %611 = vrot.lane.b32.xlu0 %v489, 16
      %v612 = vpop.permute.xlu0 %611
      %615 = vrot.lane.b32.xlu0 %v601, 24
      %v616 = vpop.permute.xlu0 %615
      %v618 = vsel %vm157, %v262, %v608
      %vm619 = vcmask 130048
      %v620 = vsel %vm619, %v618, %v612
      %vm621 = vcmask 195584
      %v622 = vsel %vm621, %v620, %v616
      %v623 = vpack.c.bf16 %v622, %v622
      %vm624 = vcmask 257024
      %625 = vst.msk [vmem:[%s138] sm:$0xf] %vm624, %v623
      %p626 = scmp.lt.s32.totalorder %s23, 1
      %s627 = scalar_select %p626, %s23, 1
      %p628 = scmp.lt.s32.totalorder %s24, 0
      %s629 = scalar_select %p628, %s24, 0
      %s630 = sadd.s32 %s629, %s627
      %s631 = smul.addr %s630, 4
      %s632 = scalar_lea.vmem %s2, %s631
      // Predicated region
      $region25: #{bert_encoder.9} parent=23 // pred_check
        %p633 = pneg %p77
      $region26: #{bert_encoder.9} parent=23 // pred_check_branch
        %635 = sbr.rel (%p633) target = $region28
      $region27: #{bert_encoder.9} parent=23 // pred_region
        _
      $region28: #{bert_encoder.9} parent=23 // pred_fallthru
        _
    $region24: #{bert_encoder.9} parent=5 // pred_fallthru
      _
    %p636 = scmp.le.s32.totalorder 2, %s14
    // Predicated region
    $region29: #{bert_encoder.9} parent=5 // pred_check
      %p637 = pneg %p636
    $region30: #{bert_encoder.9} parent=5 // pred_check_branch
      %639 = sbr.rel (%p637) target = $region32
    $region31: #{bert_encoder.9} parent=5 // pred_region
      %s640 = ssub.s32 %s14, 2
      // Predicated region
      $region33: #{bert_encoder.9} parent=31 // pred_check
        %p641 = pneg %p83
      $region34: #{bert_encoder.9} parent=31 // pred_check_branch
        %643 = sbr.rel (%p641) target = $region36
      $region35: #{bert_encoder.9} parent=31 // pred_region
        %p644 = scmp.lt.s32.totalorder %s25, 1
        %s645 = scalar_select %p644, %s25, 1
        %p646 = scmp.lt.s32.totalorder %s26, 0
        %s647 = scalar_select %p646, %s26, 0
        %s648 = sadd.s32 %s647, %s645
        %s649 = smul.addr %s648, 4
        %s650 = scalar_lea.vmem %s2, %s649
      $region36: #{bert_encoder.9} parent=31 // pred_fallthru
        _
    $region32: #{bert_encoder.9} parent=5 // pred_fallthru
      _
  $region6: #{bert_encoder.9} parent=0 // loop_footer
    %s18 = sadd.s32 1, %s14
  $region7: #{bert_encoder.9} parent=0 // loop_footer_branch
    %13 = sbr.rel target = $region3
  $region8: #{bert_encoder.9} parent=0 // loop_exit
    _

// kernel: bert_encoder.15
$region0: #{bert_encoder.15}
  #allocation0 [shape = 'u32[]', space=smem, size = 0x4, offset = 0x4, fixed_abs, tag = 'smem constant byte address 0x4 - core index']
  #allocation1 [shape = 'u32[144,128]{1,0:T(1,128)}', space=vmem, size = 0x12000, scoped, tag = 'internal scratch']
  #allocation2 [shape = 'f32[16,32]{1,0:T(8,128)}', space=vmem, size = 0x2000, scoped, tag = 'scratch operand']
  %s0 = inlined_call_operand.vmem [shape: bf16[16,32], index: 0, kind: input, shape index: {}]
  %s1 = inlined_call_operand.vmem [shape: bf16[32,64], index: 1, kind: input, shape index: {}]
  %s2 = inlined_call_operand.vmem [shape: f32[1,64], index: 2, kind: input, shape index: {}]
  %s3 = inlined_call_operand.vmem [shape: bf16[64,32], index: 3, kind: input, shape index: {}]
  %s4 = inlined_call_operand.vmem [shape: f32[1,32], index: 4, kind: input, shape index: {}]
  %s5 = inlined_call_operand.vmem [shape: f32[1,32], index: 5, kind: input, shape index: {}]
  %s6 = inlined_call_operand.vmem [shape: f32[1,32], index: 6, kind: input, shape index: {}]
  %s7 = inlined_call_operand.hbm [shape: bf16[16,32], index: 7, kind: output, shape index: {}]
  %s8 = sld [smem:[#allocation0]]
  $region46: #{bert_encoder.15} parent=0
    _
  %s10 = ssub.s32 1, %s8
  %s11 = scalar_select 0, %s10, %s8
  $region1: #{bert_encoder.15} parent=0
    #allocation3 [shape = 'u8[4096]{0}', space=vmem, size = 0x1000, scoped, tag = 'output window, operand 0, single buffered']
    #allocation4 [shape = 's32[1]{0}', space=sflag, size = 0x4, scoped, tag = 'scoped memory for bert_encoder.15']
    %12 = vsyncpa [#allocation4], 0
    // Predicated region
    $region2: #{bert_encoder.15} parent=1 // pred_check
      _
    $region3: #{bert_encoder.15} parent=1 // pred_check_branch
      %14 = sbr.rel (0) target = $region5
    $region4: #{bert_encoder.15} parent=1 // pred_region
      _
    $region5: #{bert_encoder.15} parent=1 // pred_fallthru
      _
    // Predicated region
    $region6: #{bert_encoder.15} parent=1 // pred_check
      _
    $region7: #{bert_encoder.15} parent=1 // pred_check_branch
      %16 = sbr.rel (0) target = $region9
    $region8: #{bert_encoder.15} parent=1 // pred_region
      _
    $region9: #{bert_encoder.15} parent=1 // pred_fallthru
      _
    // Predicated region
    $region10: #{bert_encoder.15} parent=1 // pred_check
      _
    $region11: #{bert_encoder.15} parent=1 // pred_check_branch
      %18 = sbr.rel (0) target = $region13
    $region12: #{bert_encoder.15} parent=1 // pred_region
      _
    $region13: #{bert_encoder.15} parent=1 // pred_fallthru
      _
    // Predicated region
    $region14: #{bert_encoder.15} parent=1 // pred_check
      _
    $region15: #{bert_encoder.15} parent=1 // pred_check_branch
      %20 = sbr.rel (0) target = $region17
    $region16: #{bert_encoder.15} parent=1 // pred_region
      _
    $region17: #{bert_encoder.15} parent=1 // pred_fallthru
      _
    // Predicated region
    $region18: #{bert_encoder.15} parent=1 // pred_check
      _
    $region19: #{bert_encoder.15} parent=1 // pred_check_branch
      %22 = sbr.rel (0) target = $region21
    $region20: #{bert_encoder.15} parent=1 // pred_region
      _
    $region21: #{bert_encoder.15} parent=1 // pred_fallthru
      _
    // Predicated region
    $region22: #{bert_encoder.15} parent=1 // pred_check
      _
    $region23: #{bert_encoder.15} parent=1 // pred_check_branch
      %24 = sbr.rel (0) target = $region25
    $region24: #{bert_encoder.15} parent=1 // pred_region
      _
    $region25: #{bert_encoder.15} parent=1 // pred_fallthru
      _
    // Predicated region
    $region26: #{bert_encoder.15} parent=1 // pred_check
      _
    $region27: #{bert_encoder.15} parent=1 // pred_check_branch
      %26 = sbr.rel (0) target = $region29
    $region28: #{bert_encoder.15} parent=1 // pred_region
      _
    $region29: #{bert_encoder.15} parent=1 // pred_fallthru
      _
    %p28 = scmp.eq.s32.totalorder 0, 0
    // Predicated region
    $region30: #{bert_encoder.15} parent=1 // pred_check
      %p29 = pneg %p28
    $region31: #{bert_encoder.15} parent=1 // pred_check_branch
      %31 = sbr.rel (%p29) target = $region33
    $region32: #{bert_encoder.15} parent=1 // pred_region
      %vm32 = vcmask 261120
      %33 = vst.msk [vmem:[#allocation2] sm:$0xff] %vm32, 0.0
      %34 = vst.msk [vmem:[#allocation2 + $0x8] sm:$0xff] %vm32, 0.0
    $region33: #{bert_encoder.15} parent=1 // pred_fallthru
      _
    %v35 = vld [vmem:[%s0] sm:$0xf]
    %v36 = vld [vmem:[%s0 + $0x4] sm:$0xf]
    %v37 = vld [vmem:[%s1] sm:$0xf]
    %v38 = vld [vmem:[%s1 + $0x4] sm:$0xf]
    %v39 = vld [vmem:[%s1 + $0x8] sm:$0xf]
    %v40 = vld [vmem:[%s1 + $0xc] sm:$0xf]
    %v41 = vld [vmem:[%s2] sm:$0x1]
    %v43 = vlaneseq
    %v44 = vshrl.u32 %v43, 7
    %v45 = vsub.s32 0, %v44
    %v46 = vrot.slane %v41, %v45
    %v50 = vunpack.c.l.b16 %v35
    %v51 = vunpack.c.l.b16 %v36
    %v52 = vpack.c.b16 %v51, %v50
    %v57 = vunpack.c.l.b16 %v37
    %v58 = vunpack.c.l.b16 %v38
    %v59 = vunpack.c.l.b16 %v39
    %v60 = vunpack.c.l.b16 %v40
    %v61 = vpack.c.b16 %v58, %v57
    %v62 = vpack.c.b16 %v60, %v59
    %vm65 = vcmask 261120
    %v67 = vsel %vm65, %v52, 0
    %69 = vmatprep.subr.bf16.mxu0 0
    %70 = vmatpush1.bf16.msra.mxu0 0
    %71 = vmatprep.subr.bf16.mxu0 0
    %72 = vmatpush1.bf16.msra.mxu0 0
    %73 = vmatprep.subr.bf16.mxu0 0
    %74 = vmatpush1.bf16.msra.mxu0 0
    %75 = vmatprep.subr.bf16.mxu0 0
    %76 = vmatpush1.bf16.msra.mxu0 0
    %77 = vmatprep.subr.bf16.mxu0 0
    %78 = vmatpush1.bf16.msra.mxu0 0
    %79 = vmatprep.subr.bf16.mxu0 0
    %80 = vmatpush1.bf16.msra.mxu0 0
    %81 = vmatprep.subr.bf16.mxu0 0
    %82 = vmatpush1.bf16.msra.mxu0 %v62
    %83 = vmatprep.subr.bf16.mxu0 0
    %84 = vmatpush1.bf16.msra.mxu0 %v61
    %85 = vmatprep.subr.bf16.mxu0 0
    %86 = vmatpush2.bf16.msra.mxu0 0
    %87 = vmatprep.subr.bf16.mxu0 0
    %88 = vmatpush2.bf16.msra.mxu0 0
    %89 = vmatprep.subr.bf16.mxu0 0
    %90 = vmatpush2.bf16.msra.mxu0 0
    %91 = vmatprep.subr.bf16.mxu0 0
    %92 = vmatpush2.bf16.msra.mxu0 0
    %93 = vmatprep.subr.bf16.mxu0 0
    %94 = vmatpush2.bf16.msra.mxu0 0
    %95 = vmatprep.subr.bf16.mxu0 0
    %96 = vmatpush2.bf16.msra.mxu0 0
    %97 = vmatprep.subr.bf16.mxu0 0
    %98 = vmatpush2.bf16.msra.mxu0 0
    %99 = vmatprep.subr.bf16.mxu0 0
    %100 = vmatpush2.bf16.msra.mxu0 0
    %101 = vmatprep.mubr.bf16.mxu0 0
    %102 = vmatmul.mubr.bf16.gmra.mxu0 %v67
    %v103 = vpop.f32.mrf.mxu0
    %v104 = vadd.f32 %v46, %v103
    %v105 = vpop.f32.mrf.mxu0
    %v106 = vpop.f32.mrf.mxu0
    %v107 = vadd.f32 %v46, %v106
    %v108 = vpop.f32.mrf.mxu0
    %109 = vdwg.mxu0
    %v110 = vmax.f32 %v104, 0.0
    %v111 = vmax.f32 %v107, 0.0
    %v112 = vld [vmem:[#allocation2] sm:$0xff]
    %v113 = vld [vmem:[#allocation2 + $0x8] sm:$0xff]
    %v114 = vpack.c.bf16 %v111, %v110
    %v115 = vld [vmem:[%s3] sm:$0xf]
    %v116 = vld [vmem:[%s3 + $0x4] sm:$0xf]
    %v117 = vld [vmem:[%s3 + $0x8] sm:$0xf]
    %v118 = vld [vmem:[%s3 + $0xc] sm:$0xf]
    %v119 = vld [vmem:[%s3 + $0x10] sm:$0xf]
    %v120 = vld [vmem:[%s3 + $0x14] sm:$0xf]
    %v121 = vld [vmem:[%s3 + $0x18] sm:$0xf]
    %v122 = vld [vmem:[%s3 + $0x1c] sm:$0xf]
    %v131 = vunpack.c.l.b16 %v115
    %v132 = vunpack.c.l.b16 %v116
    %v133 = vunpack.c.l.b16 %v117
    %v134 = vunpack.c.l.b16 %v118
    %v135 = vunpack.c.l.b16 %v119
    %v136 = vunpack.c.l.b16 %v120
    %v137 = vunpack.c.l.b16 %v121
    %v138 = vunpack.c.l.b16 %v122
    %v139 = vpack.c.b16 %v132, %v131
    %v140 = vpack.c.b16 %v134, %v133
    %v141 = vpack.c.b16 %v136, %v135
    %v142 = vpack.c.b16 %v138, %v137
    %vm147 = vcmask 523264
    %v149 = vsel %vm147, %v114, 0
    %151 = vmatprep.subr.bf16.mxu0 0
    %152 = vmatpush1.bf16.msra.mxu0 0
    %153 = vmatprep.subr.bf16.mxu0 0
    %154 = vmatpush1.bf16.msra.mxu0 0
    %155 = vmatprep.subr.bf16.mxu0 0
    %156 = vmatpush1.bf16.msra.mxu0 0
    %157 = vmatprep.subr.bf16.mxu0 0
    %158 = vmatpush1.bf16.msra.mxu0 0
    %159 = vmatprep.subr.bf16.mxu0 0
    %160 = vmatpush1.bf16.msra.mxu0 %v142
    %161 = vmatprep.subr.bf16.mxu0 0
    %162 = vmatpush1.bf16.msra.mxu0 %v141
    %163 = vmatprep.subr.bf16.mxu0 0
    %164 = vmatpush1.bf16.msra.mxu0 %v140
    %165 = vmatprep.subr.bf16.mxu0 0
    %166 = vmatpush1.bf16.msra.mxu0 %v139
    %167 = vmatprep.subr.bf16.mxu0 0
    %168 = vmatpush2.bf16.msra.mxu0 0
    %169 = vmatprep.subr.bf16.mxu0 0
    %170 = vmatpush2.bf16.msra.mxu0 0
    %171 = vmatprep.subr.bf16.mxu0 0
    %172 = vmatpush2.bf16.msra.mxu0 0
    %173 = vmatprep.subr.bf16.mxu0 0
    %174 = vmatpush2.bf16.msra.mxu0 0
    %175 = vmatprep.subr.bf16.mxu0 0
    %176 = vmatpush2.bf16.msra.mxu0 0
    %177 = vmatprep.subr.bf16.mxu0 0
    %178 = vmatpush2.bf16.msra.mxu0 0
    %179 = vmatprep.subr.bf16.mxu0 0
    %180 = vmatpush2.bf16.msra.mxu0 0
    %181 = vmatprep.subr.bf16.mxu0 0
    %182 = vmatpush2.bf16.msra.mxu0 0
    %183 = vmatprep.mubr.bf16.mxu0 0
    %184 = vmatmul.mubr.bf16.gmra.mxu0 %v149
    %v185 = vpop.f32.mrf.mxu0
    %v186 = vadd.f32 0.0, %v185
    %v187 = vpop.f32.mrf.mxu0
    %v188 = vpop.f32.mrf.mxu0
    %v189 = vadd.f32 0.0, %v188
    %v190 = vpop.f32.mrf.mxu0
    %191 = vdwg.mxu0
    %v192 = vadd.f32 %v112, %v186
    %v193 = vadd.f32 %v113, %v189
    %194 = vst.msk [vmem:[#allocation2] sm:$0xff] %vm65, %v192
    %195 = vst.msk [vmem:[#allocation2 + $0x8] sm:$0xff] %vm65, %v193
    // Predicated region
    $region34: #{bert_encoder.15} parent=1 // pred_check
      %p196 = pneg %p28
    $region35: #{bert_encoder.15} parent=1 // pred_check_branch
      %198 = sbr.rel (%p196) target = $region37
    $region36: #{bert_encoder.15} parent=1 // pred_region
      %v199 = vld [vmem:[#allocation2] sm:$0xff]
      %v200 = vld [vmem:[#allocation2 + $0x8] sm:$0xff]
      %v201 = vld [vmem:[%s4] sm:$0x1]
      %v203 = vlaneseq
      %v204 = vshrl.u32 %v203, 7
      %v205 = vsub.s32 0, %v204
      %v206 = vrot.slane %v201, %v205
      %v208 = vadd.f32 %v199, %v206
      %v209 = vadd.f32 %v200, %v206
      %v210 = vunpack.c.l.bf16 %v35
      %v211 = vunpack.c.l.bf16 %v36
      %v212 = vadd.f32 %v208, %v210
      %v213 = vadd.f32 %v209, %v211
      %v214 = vsel %vm65, %v212, 0.0
      %215 = vadd.xlane.f32.xlu0 %v214
      %v216 = vpop.xlane.xlu0 %215
      %v217 = vsel %vm65, %v213, 0.0
      %218 = vadd.xlane.f32.xlu0 %v217
      %v219 = vpop.xlane.xlu0 %218
      %v220 = vrcp.pop 32.0
      %v221 = vmul.f32 %v216, %v220
      %v222 = vmul.f32 %v219, %v220
      %v223 = vsub.f32 %v212, %v221
      %v224 = vsub.f32 %v213, %v222
      %v225 = vmul.f32 %v223, %v223
      %v226 = vmul.f32 %v224, %v224
      %v227 = vsel %vm65, %v225, 0.0
      %228 = vadd.xlane.f32.xlu0 %v227
      %v229 = vpop.xlane.xlu0 %228
      %v230 = vsel %vm65, %v226, 0.0
      %231 = vadd.xlane.f32.xlu0 %v230
      %v232 = vpop.xlane.xlu0 %231
      %v233 = vmul.f32 %v229, %v220
      %v234 = vmul.f32 %v232, %v220
      %v235 = vadd.f32 %v233, 1e-05
      %v236 = vadd.f32 %v234, 1e-05
      %v237 = vrsqrt.pop %v235
      %v238 = vrsqrt.pop %v236
      %v239 = vmul.f32 %v223, %v237
      %v240 = vmul.f32 %v224, %v238
      %v241 = vld [vmem:[%s5] sm:$0x1]
      %v243 = vlaneseq
      %v244 = vshrl.u32 %v243, 7
      %v245 = vsub.s32 0, %v244
      %v246 = vrot.slane %v241, %v245
      %v248 = vmul.f32 %v239, %v246
      %v249 = vmul.f32 %v240, %v246
      %v250 = vld [vmem:[%s6] sm:$0x1]
      %v252 = vlaneseq
      %v253 = vshrl.u32 %v252, 7
      %v254 = vsub.s32 0, %v253
      %v255 = vrot.slane %v250, %v254
      %v257 = vadd.f32 %v248, %v255
      %v258 = vadd.f32 %v249, %v255
      %v259 = vpack.c.bf16 %v258, %v257
      %v261 = vunpack.c.l.b16 %v259
      %v262 = vunpack.c.h.b16 %v259
      %v263 = vpack.c.b16 %v261, %v261
      %v264 = vpack.c.b16 %v262, %v262
      %vm267 = vcmask 257024
      %268 = vst.msk [vmem:[#allocation3] sm:$0xf] %vm267, %v263
      %269 = vst.msk [vmem:[#allocation3 + $0x4] sm:$0xf] %vm267, %v264
    $region37: #{bert_encoder.15} parent=1 // pred_fallthru
      _
    // Predicated region
    $region38: #{bert_encoder.15} parent=1 // pred_check
      _
    $region39: #{bert_encoder.15} parent=1 // pred_check_branch
      %271 = sbr.rel (0) target = $region41
    $region40: #{bert_encoder.15} parent=1 // pred_region
      %s273 = ssub.s32 128, 128
      %274 = vsyncadd [#allocation4], %s273
      %s275 = sshll.u32 [#allocation3], 4
      %s276 = int_to_ptr.vmem [resolvable:$true] %s275
      %281 = dma.vmem_to_hbm [thread:$0]  %s276, 128, %s7, [#allocation4], 64, 64, 4
    $region41: #{bert_encoder.15} parent=1 // pred_fallthru
      _
    // Predicated region
    $region42: #{bert_encoder.15} parent=1 // pred_check
      _
    $region43: #{bert_encoder.15} parent=1 // pred_check_branch
      %283 = sbr.rel (0) target = $region45
    $region44: #{bert_encoder.15} parent=1 // pred_region
      %284 = dma.done [#allocation4], 128
    $region45: #{bert_encoder.15} parent=1 // pred_fallthru
      _
    %285 = vsyncpa [#allocation4], 1

</llo_original>
